<compile_context>
chip_gen: v6e
topology: v6e:2x2x1
jax: 0.10.0
libtpu: 0.0.40
codegen_flags: <defaults>
</compile_context>

<pallas_src>
import math

import jax
import jax.numpy as jnp
from jax import lax
from jax.experimental import pallas as pl
from jax.experimental.pallas import tpu as pltpu


# --------------------------- ALBERT config (small) --------------------------
VOCAB = 100
MAX_POS = 64
TYPE_VOCAB = 2
EMB = 32            # embedding_size (factorized, < hidden)
HID = 64            # hidden_size
NH = 4              # num_attention_heads
DH = HID // NH      # head dim
FF = 128            # intermediate_size
LAYERS = 2          # num_hidden_layers (ALBERT: ONE shared layer applied LAYERS times)
N_CLASSES = 3
CLS_PAD = 128       # lane-dense padded classifier width
LN_EPS = 1e-12
NEG_INF = -1e9

# ---- packed bf16 weight-matrix slab: row offsets (lane width = W_COLS) ----
W_COLS = 3 * HID            # 192
R_PROJ = 0                  # proj_w  [EMB, HID]
R_QKV = R_PROJ + EMB        # qkv_w   [HID, 3*HID]   (q columns pre-scaled by 1/sqrt(DH))
R_O = R_QKV + HID           # o_w     [HID, HID]
R_FF1 = R_O + HID           # ff1_w   [HID, FF]
R_FF2 = R_FF1 + HID         # ff2_w   [FF, HID]
R_POOL = R_FF2 + FF         # pool_w  [HID, HID]
R_CLS = R_POOL + HID        # cls_w   [HID, CLS_PAD]
W_ROWS = R_CLS + HID        # 480

# ---- packed f32 small-vector slab: one row per bias / LN param ----
V_COLS = 3 * HID            # 192 (max width = qkv bias)
(V_EMB_LN_G, V_EMB_LN_B, V_PROJ_B, V_QKV_B, V_O_B, V_LN1_G, V_LN1_B,
 V_FF1_B, V_FF2_B, V_LN2_G, V_LN2_B, V_POOL_B, V_CLS_B) = range(13)
V_ROWS = 16


# ------------------------------ kernel helpers -------------------------------

def _layernorm(x, g, b):
    mean = jnp.mean(x, axis=-1, keepdims=True)
    var = jnp.mean(jnp.square(x - mean), axis=-1, keepdims=True)
    return (x - mean) * lax.rsqrt(var + LN_EPS) * g + b


def _gelu_new(y):
    # ALBERT's gelu_new (tanh approximation)
    return 0.5 * y * (1.0 + jnp.tanh(0.7978845608028654 * (y + 0.044715 * y * y * y)))


def _make_kernel(BB, S):
    """One grid step = one chunk of BB sequences (T = BB*S tokens), fully VMEM-resident."""
    T = BB * S

    def kernel(emb_ref, mask_ref, wmat_ref, vec_ref, const_ref, out_ref):
        f32, bf16 = jnp.float32, jnp.bfloat16

        # --- hoisted parameter loads (reused across the statically unrolled layers) ---
        proj_w = wmat_ref[R_PROJ:R_PROJ + EMB, 0:HID]
        qkv_w = wmat_ref[R_QKV:R_QKV + HID, 0:3 * HID]
        o_w = wmat_ref[R_O:R_O + HID, 0:HID]
        ff1_w = wmat_ref[R_FF1:R_FF1 + HID, 0:FF]
        ff2_w = wmat_ref[R_FF2:R_FF2 + FF, 0:HID]
        pool_w = wmat_ref[R_POOL:R_POOL + HID, 0:HID]
        cls_w = wmat_ref[R_CLS:R_CLS + HID, 0:CLS_PAD]

        emb_ln_g = vec_ref[V_EMB_LN_G:V_EMB_LN_G + 1, 0:EMB]
        emb_ln_b = vec_ref[V_EMB_LN_B:V_EMB_LN_B + 1, 0:EMB]
        proj_b = vec_ref[V_PROJ_B:V_PROJ_B + 1, 0:HID]
        qkv_b = vec_ref[V_QKV_B:V_QKV_B + 1, 0:3 * HID]
        o_b = vec_ref[V_O_B:V_O_B + 1, 0:HID]
        ln1_g = vec_ref[V_LN1_G:V_LN1_G + 1, 0:HID]
        ln1_b = vec_ref[V_LN1_B:V_LN1_B + 1, 0:HID]
        ff1_b = vec_ref[V_FF1_B:V_FF1_B + 1, 0:FF]
        ff2_b = vec_ref[V_FF2_B:V_FF2_B + 1, 0:HID]
        ln2_g = vec_ref[V_LN2_G:V_LN2_G + 1, 0:HID]
        ln2_b = vec_ref[V_LN2_B:V_LN2_B + 1, 0:HID]
        pool_b = vec_ref[V_POOL_B:V_POOL_B + 1, 0:HID]
        cls_b = vec_ref[V_CLS_B:V_CLS_B + 1, 0:CLS_PAD]

        headmask = const_ref[:, 0:HID]                              # [NH*T, HID]
        blockones = const_ref[:, HID:HID + NH * T]                  # [NH*T, NH*T]
        sel = const_ref[0:BB, HID + NH * T:HID + NH * T + T]        # [BB, T] CLS selector
        attn_mask = mask_ref[0]                                     # [T, NH*T] additive

        # --- embeddings: LayerNorm + factorized EMB->HID projection on the whole slab ---
        e = _layernorm(emb_ref[0].astype(f32), emb_ln_g, emb_ln_b)          # [T, EMB]
        x = jnp.dot(e.astype(bf16), proj_w, preferred_element_type=f32) + proj_b  # [T, HID]

        # --- shared-weight transformer stack (weights stay in VMEM, loop unrolled) ---
        for _ in range(LAYERS):
            qkv = jnp.dot(x.astype(bf16), qkv_w, preferred_element_type=f32) + qkv_b
            q = qkv[:, 0:HID]                 # pre-scaled by 1/sqrt(DH) in the wrapper
            k = qkv[:, HID:2 * HID]
            v = qkv[:, 2 * HID:3 * HID]

            # Head-block-diagonal expansion: replicate K/V along sublanes (NH copies)
            # and zero all lanes not belonging to each copy's head.  All heads are then
            # handled by two plain 2-D matmuls — no per-head slices, no concat.
            kbig = jnp.concatenate([k] * NH, axis=0) * headmask     # [NH*T, HID]
            vbig = jnp.concatenate([v] * NH, axis=0) * headmask     # [NH*T, HID]

            # scores: column block h (width T) holds head h's scores
            s = lax.dot_general(q.astype(bf16), kbig.astype(bf16),
                                (((1,), (1,)), ((), ())),
                                preferred_element_type=f32)          # [T, NH*T]
            s = s + attn_mask
            s = s - jnp.max(s, axis=-1, keepdims=True)   # per-row constant shift (safe)
            p = jnp.exp(s)
            denom = jnp.dot(p, blockones, preferred_element_type=f32)   # per-head sums
            p = p / denom                                            # exact softmax
            ctx = jnp.dot(p.astype(bf16), vbig.astype(bf16),
                          preferred_element_type=f32)                # [T, HID], heads in place

            attn_out = jnp.dot(ctx.astype(bf16), o_w, preferred_element_type=f32) + o_b
            x = _layernorm(x + attn_out, ln1_g, ln1_b)

            h1 = _gelu_new(jnp.dot(x.astype(bf16), ff1_w,
                                   preferred_element_type=f32) + ff1_b)
            h2 = jnp.dot(h1.astype(bf16), ff2_w, preferred_element_type=f32) + ff2_b
            x = _layernorm(x + h2, ln2_g, ln2_b)

        # --- pooler: tanh(W * x[CLS]) for every sequence in the chunk (one matmul) ---
        cls_tok = jnp.dot(sel, x, preferred_element_type=f32)               # [BB, HID]
        pooled = jnp.tanh(jnp.dot(cls_tok.astype(bf16), pool_w,
                                  preferred_element_type=f32) + pool_b)
        # dropout(p=0.3): identity (eval mode)
        logits = jnp.dot(pooled.astype(bf16), cls_w,
                         preferred_element_type=f32) + cls_b                 # [BB, CLS_PAD]
        out_ref[0] = logits.astype(out_ref.dtype)

    return kernel


# ------------------------------ pallas_call wrapper --------------------------

def albert_fused_forward(emb_chunks, mask_chunks, wmat, vecs, consts, BB, S):
    C = emb_chunks.shape[0]
    T = BB * S
    out = pl.pallas_call(
        _make_kernel(BB, S),
        out_shape=jax.ShapeDtypeStruct((C, BB, CLS_PAD), jnp.float32),
        grid=(C,),
        in_specs=[
            pl.BlockSpec((1, T, EMB), lambda c: (c, 0, 0)),
            pl.BlockSpec((1, T, NH * T), lambda c: (c, 0, 0)),
            pl.BlockSpec(wmat.shape, lambda c: (0, 0)),    # packed matrices (constant block)
            pl.BlockSpec(vecs.shape, lambda c: (0, 0)),    # packed biases / LN params
            pl.BlockSpec(consts.shape, lambda c: (0, 0)),  # head masks / selector constants
        ],
        out_specs=pl.BlockSpec((1, BB, CLS_PAD), lambda c: (c, 0, 0)),
        compiler_params=pltpu.CompilerParams(
            dimension_semantics=("parallel",)),            # v7x: 2 chunks -> 2 TensorCores
    )(emb_chunks, mask_chunks, wmat, vecs, consts)
    return out


# ------------------------------ parameters ----------------------------------

def init_params(seed=0):
    key = jax.random.PRNGKey(seed)
    ks = iter(jax.random.split(key, 32))
    n = lambda shape, s=0.02: (s * jax.random.normal(next(ks), shape)).astype(jnp.float32)
    zeros = lambda shape: jnp.zeros(shape, jnp.float32)
    ones = lambda shape: jnp.ones(shape, jnp.float32)
    return {
        "word_emb": n((VOCAB, EMB)),
        "pos_emb": n((MAX_POS, EMB)),
        "tok_emb": n((TYPE_VOCAB, EMB)),
        "emb_ln_g": ones((1, EMB)), "emb_ln_b": zeros((1, EMB)),
        "proj_w": n((EMB, HID)), "proj_b": zeros((1, HID)),
        "layer": {                                  # shared across all LAYERS iterations
            "q_w": n((HID, HID)), "q_b": zeros((1, HID)),
            "k_w": n((HID, HID)), "k_b": zeros((1, HID)),
            "v_w": n((HID, HID)), "v_b": zeros((1, HID)),
            "o_w": n((HID, HID)), "o_b": zeros((1, HID)),
            "ln1_g": ones((1, HID)), "ln1_b": zeros((1, HID)),
            "ff1_w": n((HID, FF)), "ff1_b": zeros((1, FF)),
            "ff2_w": n((FF, HID)), "ff2_b": zeros((1, HID)),
            "ln2_g": ones((1, HID)), "ln2_b": zeros((1, HID)),
        },
        "pool_w": n((HID, HID)), "pool_b": zeros((1, HID)),            # pooler
        "cls_w": n((HID, N_CLASSES)), "cls_b": zeros((1, N_CLASSES)),  # self.output
    }


# --------------------------- host-side packing / glue ------------------------

def _pack_weights(params):
    lp = params["layer"]
    scale = 1.0 / math.sqrt(DH)
    qkv_w = jnp.concatenate([lp["q_w"] * scale, lp["k_w"], lp["v_w"]], axis=1)
    qkv_b = jnp.concatenate([lp["q_b"] * scale, lp["k_b"], lp["v_b"]], axis=1)
    cls_w = jnp.pad(params["cls_w"], ((0, 0), (0, CLS_PAD - N_CLASSES)))
    cls_b = jnp.pad(params["cls_b"], ((0, 0), (0, CLS_PAD - N_CLASSES)))

    padw = lambda w: jnp.pad(w, ((0, 0), (0, W_COLS - w.shape[1])))
    wmat = jnp.concatenate(
        [padw(params["proj_w"]), padw(qkv_w), padw(lp["o_w"]), padw(lp["ff1_w"]),
         padw(lp["ff2_w"]), padw(params["pool_w"]), padw(cls_w)],
        axis=0).astype(jnp.bfloat16)                                   # [W_ROWS, W_COLS]

    padv = lambda v: jnp.pad(v, ((0, 0), (0, V_COLS - v.shape[1])))
    vec_list = [params["emb_ln_g"], params["emb_ln_b"], params["proj_b"], qkv_b,
                lp["o_b"], lp["ln1_g"], lp["ln1_b"], lp["ff1_b"], lp["ff2_b"],
                lp["ln2_g"], lp["ln2_b"], params["pool_b"], cls_b]
    vecs = jnp.concatenate(
        [padv(v) for v in vec_list]
        + [jnp.zeros((V_ROWS - len(vec_list), V_COLS), jnp.float32)], axis=0)
    return wmat, vecs


def _build_consts(BB, S):
    """Head-expansion mask, per-head block-ones matrix and CLS-row selector."""
    T = BB * S
    head_of_row = jnp.arange(NH * T) // T
    headmask = (head_of_row[:, None] ==
                (jnp.arange(HID) // DH)[None, :]).astype(jnp.float32)     # [NH*T, HID]
    blockones = (head_of_row[:, None] == head_of_row[None, :]).astype(jnp.float32)
    sel = (jnp.arange(BB)[:, None] * S == jnp.arange(T)[None, :]).astype(jnp.float32)
    sel = jnp.pad(sel, ((0, NH * T - BB), (0, 0)))
    return jnp.concatenate([headmask, blockones, sel], axis=1)            # [NH*T, HID+NH*T+T]


def _build_attn_mask(attention_mask, BB, S):
    """Additive mask per chunk: padding + batch-block-diagonality, pre-tiled per head."""
    B = attention_mask.shape[0]
    C = B // BB
    T = BB * S
    key_ok = attention_mask.astype(jnp.float32).reshape(C, T)             # [C, T]
    bidx = jnp.arange(T) // S
    same_batch = (bidx[:, None] == bidx[None, :]).astype(jnp.float32)     # [T, T]
    allowed = same_batch[None, :, :] * key_ok[:, None, :]                 # [C, T, T]
    add = (1.0 - allowed) * NEG_INF
    return jnp.tile(add, (1, 1, NH))                                      # [C, T, NH*T]


# ------------------------------ forward (jit) --------------------------------

@jax.jit
def albert_base_forward(params, input_ids, attention_mask, token_type_ids):
    """Matches ALBERTBase.forward (add_noise=None path, eval-mode dropout)."""
    B, S = input_ids.shape
    num_chunks = 2 if (B >= 2 and B % 2 == 0) else 1    # keep both v7x TCs busy
    BB = B // num_chunks

    # --- embedding gathers (plain-JAX glue, not expressible as a rectangular BlockSpec) ---
    emb = (params["word_emb"][input_ids]
           + params["pos_emb"][:S][None, :, :]
           + params["tok_emb"][token_type_ids])                            # [B, S, EMB]
    emb_chunks = emb.reshape(num_chunks, BB * S, EMB)

    mask_chunks = _build_attn_mask(attention_mask, BB, S)
    wmat, vecs = _pack_weights(params)
    consts = _build_consts(BB, S)

    out = albert_fused_forward(emb_chunks, mask_chunks, wmat, vecs, consts, BB, S)
    return out.reshape(B, CLS_PAD)[:, :N_CLASSES]


# --------------------------------- main --------------------------------------

if __name__ == "__main__":
    B, S = 4, 8
    key = jax.random.PRNGKey(0)
    k_ids, _ = jax.random.split(key)

    input_ids = jax.random.randint(k_ids, (B, S), 0, VOCAB, dtype=jnp.int32)
    attention_mask = jnp.ones((B, S), dtype=jnp.int32)
    attention_mask = attention_mask.at[1, 6:].set(0).at[3, 5:].set(0)      # some padding
    token_type_ids = jnp.zeros((B, S), dtype=jnp.int32)

    params = init_params(seed=0)

    logits = albert_base_forward(params, input_ids, attention_mask, token_type_ids)
    logits = jax.block_until_ready(logits)
    assert logits.shape == (B, N_CLASSES)
    assert bool(jnp.all(jnp.isfinite(logits)))
    print("KERNEL_OK")
</pallas_src>

<mosaic_0001>
module attributes {stable_mosaic.version = 11 : i64} {
  func.func @kernel(%arg0: i32, %arg1: memref<1x16x32xf32, #tpu.memory_space<vmem>>, %arg2: memref<1x16x64xf32, #tpu.memory_space<vmem>>, %arg3: memref<480x192xbf16, #tpu.memory_space<vmem>>, %arg4: memref<16x192xf32, #tpu.memory_space<vmem>>, %arg5: memref<64x144xf32, #tpu.memory_space<vmem>>, %arg6: memref<1x2x128xf32, #tpu.memory_space<vmem>>) attributes {dimension_semantics = [#tpu.dimension_semantics<parallel>], iteration_bounds = array<i64: 2>, scalar_prefetch = 0 : i64, scratch_operands = 0 : i64, tpu.core_type = #tpu.core_type<tc>, window_params = [{transform_indices = @transform_0, window_bounds = array<i64: 1, 16, 32>}, {transform_indices = @transform_1, window_bounds = array<i64: 1, 16, 64>}, {pipeline_mode = #tpu.pipeline_mode<synchronous>, transform_indices = @transform_2, window_bounds = array<i64: 480, 192>}, {pipeline_mode = #tpu.pipeline_mode<synchronous>, transform_indices = @transform_3, window_bounds = array<i64: 16, 192>}, {pipeline_mode = #tpu.pipeline_mode<synchronous>, transform_indices = @transform_4, window_bounds = array<i64: 64, 144>}, {transform_indices = @transform_5, window_bounds = array<i64: 1, 2, 128>}]} {
    %c0 = arith.constant 0 : index
    %c0_0 = arith.constant 0 : index
    %0 = vector.load %arg3[%c0, %c0_0] : memref<480x192xbf16, #tpu.memory_space<vmem>>, vector<32x64xbf16>
    %c32 = arith.constant 32 : index
    %c0_1 = arith.constant 0 : index
    %1 = vector.load %arg3[%c32, %c0_1] : memref<480x192xbf16, #tpu.memory_space<vmem>>, vector<64x192xbf16>
    %c96 = arith.constant 96 : index
    %c0_2 = arith.constant 0 : index
    %2 = vector.load %arg3[%c96, %c0_2] : memref<480x192xbf16, #tpu.memory_space<vmem>>, vector<64x64xbf16>
    %c160 = arith.constant 160 : index
    %c0_3 = arith.constant 0 : index
    %3 = vector.load %arg3[%c160, %c0_3] : memref<480x192xbf16, #tpu.memory_space<vmem>>, vector<64x128xbf16>
    %c224 = arith.constant 224 : index
    %c0_4 = arith.constant 0 : index
    %4 = vector.load %arg3[%c224, %c0_4] : memref<480x192xbf16, #tpu.memory_space<vmem>>, vector<128x64xbf16>
    %c352 = arith.constant 352 : index
    %c0_5 = arith.constant 0 : index
    %5 = vector.load %arg3[%c352, %c0_5] : memref<480x192xbf16, #tpu.memory_space<vmem>>, vector<64x64xbf16>
    %c416 = arith.constant 416 : index
    %c0_6 = arith.constant 0 : index
    %6 = vector.load %arg3[%c416, %c0_6] : memref<480x192xbf16, #tpu.memory_space<vmem>>, vector<64x128xbf16>
    %c0_7 = arith.constant 0 : index
    %c0_8 = arith.constant 0 : index
    %7 = vector.load %arg4[%c0_7, %c0_8] : memref<16x192xf32, #tpu.memory_space<vmem>>, vector<1x32xf32>
    %c1 = arith.constant 1 : index
    %c0_9 = arith.constant 0 : index
    %8 = vector.load %arg4[%c1, %c0_9] : memref<16x192xf32, #tpu.memory_space<vmem>>, vector<1x32xf32>
    %c2 = arith.constant 2 : index
    %c0_10 = arith.constant 0 : index
    %9 = vector.load %arg4[%c2, %c0_10] : memref<16x192xf32, #tpu.memory_space<vmem>>, vector<1x64xf32>
    %c3 = arith.constant 3 : index
    %c0_11 = arith.constant 0 : index
    %10 = vector.load %arg4[%c3, %c0_11] : memref<16x192xf32, #tpu.memory_space<vmem>>, vector<1x192xf32>
    %c4 = arith.constant 4 : index
    %c0_12 = arith.constant 0 : index
    %11 = vector.load %arg4[%c4, %c0_12] : memref<16x192xf32, #tpu.memory_space<vmem>>, vector<1x64xf32>
    %c5 = arith.constant 5 : index
    %c0_13 = arith.constant 0 : index
    %12 = vector.load %arg4[%c5, %c0_13] : memref<16x192xf32, #tpu.memory_space<vmem>>, vector<1x64xf32>
    %c6 = arith.constant 6 : index
    %c0_14 = arith.constant 0 : index
    %13 = vector.load %arg4[%c6, %c0_14] : memref<16x192xf32, #tpu.memory_space<vmem>>, vector<1x64xf32>
    %c7 = arith.constant 7 : index
    %c0_15 = arith.constant 0 : index
    %14 = vector.load %arg4[%c7, %c0_15] : memref<16x192xf32, #tpu.memory_space<vmem>>, vector<1x128xf32>
    %c8 = arith.constant 8 : index
    %c0_16 = arith.constant 0 : index
    %15 = vector.load %arg4[%c8, %c0_16] : memref<16x192xf32, #tpu.memory_space<vmem>>, vector<1x64xf32>
    %c9 = arith.constant 9 : index
    %c0_17 = arith.constant 0 : index
    %16 = vector.load %arg4[%c9, %c0_17] : memref<16x192xf32, #tpu.memory_space<vmem>>, vector<1x64xf32>
    %c10 = arith.constant 10 : index
    %c0_18 = arith.constant 0 : index
    %17 = vector.load %arg4[%c10, %c0_18] : memref<16x192xf32, #tpu.memory_space<vmem>>, vector<1x64xf32>
    %c11 = arith.constant 11 : index
    %c0_19 = arith.constant 0 : index
    %18 = vector.load %arg4[%c11, %c0_19] : memref<16x192xf32, #tpu.memory_space<vmem>>, vector<1x64xf32>
    %c12 = arith.constant 12 : index
    %c0_20 = arith.constant 0 : index
    %19 = vector.load %arg4[%c12, %c0_20] : memref<16x192xf32, #tpu.memory_space<vmem>>, vector<1x128xf32>
    %c0_21 = arith.constant 0 : index
    %c0_22 = arith.constant 0 : index
    %20 = vector.load %arg5[%c0_21, %c0_22] : memref<64x144xf32, #tpu.memory_space<vmem>>, vector<64x64xf32>
    %c0_23 = arith.constant 0 : index
    %c64 = arith.constant 64 : index
    %21 = vector.load %arg5[%c0_23, %c64] : memref<64x144xf32, #tpu.memory_space<vmem>>, vector<64x64xf32>
    %c0_24 = arith.constant 0 : index
    %c128 = arith.constant 128 : index
    %22 = vector.load %arg5[%c0_24, %c128] : memref<64x144xf32, #tpu.memory_space<vmem>>, vector<2x16xf32>
    %c0_25 = arith.constant 0 : index
    %c0_26 = arith.constant 0 : index
    %c0_27 = arith.constant 0 : index
    %23 = vector.load %arg2[%c0_25, %c0_26, %c0_27] : memref<1x16x64xf32, #tpu.memory_space<vmem>>, vector<1x16x64xf32>
    %24 = vector.shape_cast %23 : vector<1x16x64xf32> to vector<16x64xf32>
    %c0_28 = arith.constant 0 : index
    %c0_29 = arith.constant 0 : index
    %c0_30 = arith.constant 0 : index
    %25 = vector.load %arg1[%c0_28, %c0_29, %c0_30] : memref<1x16x32xf32, #tpu.memory_space<vmem>>, vector<1x16x32xf32>
    %26 = vector.shape_cast %25 : vector<1x16x32xf32> to vector<16x32xf32>
    %cst = arith.constant dense<0.000000e+00> : vector<16xf32>
    %27 = vector.multi_reduction <add>, %26, %cst [1] : vector<16x32xf32> to vector<16xf32>
    %28 = vector.shape_cast %27 : vector<16xf32> to vector<16x1xf32>
    %cst_31 = arith.constant 3.200000e+01 : f32
    %29 = vector.broadcast %cst_31 : f32 to vector<16x1xf32>
    %30 = arith.divf %28, %29 : vector<16x1xf32>
    %31 = vector.broadcast %30 : vector<16x1xf32> to vector<16x32xf32>
    %32 = arith.subf %26, %31 : vector<16x32xf32>
    %33 = arith.mulf %32, %32 : vector<16x32xf32>
    %cst_32 = arith.constant dense<0.000000e+00> : vector<16xf32>
    %34 = vector.multi_reduction <add>, %33, %cst_32 [1] : vector<16x32xf32> to vector<16xf32>
    %35 = vector.shape_cast %34 : vector<16xf32> to vector<16x1xf32>
    %cst_33 = arith.constant 3.200000e+01 : f32
    %36 = vector.broadcast %cst_33 : f32 to vector<16x1xf32>
    %37 = arith.divf %35, %36 : vector<16x1xf32>
    %38 = vector.broadcast %30 : vector<16x1xf32> to vector<16x32xf32>
    %39 = arith.subf %26, %38 : vector<16x32xf32>
    %cst_34 = arith.constant 9.99999996E-13 : f32
    %40 = vector.broadcast %cst_34 : f32 to vector<16x1xf32>
    %41 = arith.addf %37, %40 : vector<16x1xf32>
    %42 = math.rsqrt %41 : vector<16x1xf32>
    %43 = vector.broadcast %42 : vector<16x1xf32> to vector<16x32xf32>
    %44 = arith.mulf %39, %43 : vector<16x32xf32>
    %45 = vector.broadcast %7 : vector<1x32xf32> to vector<16x32xf32>
    %46 = arith.mulf %44, %45 : vector<16x32xf32>
    %47 = vector.broadcast %8 : vector<1x32xf32> to vector<16x32xf32>
    %48 = arith.addf %46, %47 : vector<16x32xf32>
    %49 = arith.truncf %48 : vector<16x32xf32> to vector<16x32xbf16>
    %cst_35 = arith.constant dense<0.000000e+00> : vector<16x64xf32>
    %50 = tpu.matmul %49, %0, %cst_35 {dimension_numbers = #tpu.dot_dimension_numbers<[1], [0], [0], [1], [0, 0, 1, 1], [], []>} : vector<16x32xbf16>, vector<32x64xbf16>, vector<16x64xf32> -> vector<16x64xf32>
    %51 = vector.broadcast %9 : vector<1x64xf32> to vector<16x64xf32>
    %52 = arith.addf %50, %51 : vector<16x64xf32>
    %53 = arith.truncf %52 : vector<16x64xf32> to vector<16x64xbf16>
    %cst_36 = arith.constant dense<0.000000e+00> : vector<16x192xf32>
    %54 = tpu.matmul %53, %1, %cst_36 {dimension_numbers = #tpu.dot_dimension_numbers<[1], [0], [0], [1], [0, 0, 1, 1], [], []>} : vector<16x64xbf16>, vector<64x192xbf16>, vector<16x192xf32> -> vector<16x192xf32>
    %55 = vector.broadcast %10 : vector<1x192xf32> to vector<16x192xf32>
    %56 = arith.addf %54, %55 : vector<16x192xf32>
    %57 = vector.extract_strided_slice %56 {offsets = [0, 0], sizes = [16, 64], strides = [1, 1]} : vector<16x192xf32> to vector<16x64xf32>
    %58 = vector.extract_strided_slice %56 {offsets = [0, 64], sizes = [16, 64], strides = [1, 1]} : vector<16x192xf32> to vector<16x64xf32>
    %59 = vector.extract_strided_slice %56 {offsets = [0, 128], sizes = [16, 64], strides = [1, 1]} : vector<16x192xf32> to vector<16x64xf32>
    %60 = tpu.concatenate %58, %58, %58, %58 in 0 : vector<16x64xf32>, vector<16x64xf32>, vector<16x64xf32>, vector<16x64xf32> -> vector<64x64xf32>
    %61 = arith.mulf %60, %20 : vector<64x64xf32>
    %62 = tpu.concatenate %59, %59, %59, %59 in 0 : vector<16x64xf32>, vector<16x64xf32>, vector<16x64xf32>, vector<16x64xf32> -> vector<64x64xf32>
    %63 = arith.mulf %62, %20 : vector<64x64xf32>
    %64 = arith.truncf %57 : vector<16x64xf32> to vector<16x64xbf16>
    %65 = arith.truncf %61 : vector<64x64xf32> to vector<64x64xbf16>
    %cst_37 = arith.constant dense<0.000000e+00> : vector<16x64xf32>
    %66 = tpu.matmul %64, %65, %cst_37 {dimension_numbers = #tpu.dot_dimension_numbers<[1], [1], [0], [0], [0, 0, 1, 0], [], []>} : vector<16x64xbf16>, vector<64x64xbf16>, vector<16x64xf32> -> vector<16x64xf32>
    %67 = arith.addf %66, %24 : vector<16x64xf32>
    %cst_38 = arith.constant dense<0xFF800000> : vector<16xf32>
    %68 = vector.multi_reduction <maximumf>, %67, %cst_38 [1] : vector<16x64xf32> to vector<16xf32>
    %69 = vector.shape_cast %68 : vector<16xf32> to vector<16x1xf32>
    %70 = vector.broadcast %69 : vector<16x1xf32> to vector<16x64xf32>
    %71 = arith.subf %67, %70 : vector<16x64xf32>
    %72 = math.exp %71 : vector<16x64xf32>
    %cst_39 = arith.constant dense<0.000000e+00> : vector<16x64xf32>
    %73 = tpu.matmul %72, %21, %cst_39 {dimension_numbers = #tpu.dot_dimension_numbers<[1], [0], [0], [1], [0, 0, 1, 1], [], []>} : vector<16x64xf32>, vector<64x64xf32>, vector<16x64xf32> -> vector<16x64xf32>
    %74 = arith.divf %72, %73 : vector<16x64xf32>
    %75 = arith.truncf %74 : vector<16x64xf32> to vector<16x64xbf16>
    %76 = arith.truncf %63 : vector<64x64xf32> to vector<64x64xbf16>
    %cst_40 = arith.constant dense<0.000000e+00> : vector<16x64xf32>
    %77 = tpu.matmul %75, %76, %cst_40 {dimension_numbers = #tpu.dot_dimension_numbers<[1], [0], [0], [1], [0, 0, 1, 1], [], []>} : vector<16x64xbf16>, vector<64x64xbf16>, vector<16x64xf32> -> vector<16x64xf32>
    %78 = arith.truncf %77 : vector<16x64xf32> to vector<16x64xbf16>
    %cst_41 = arith.constant dense<0.000000e+00> : vector<16x64xf32>
    %79 = tpu.matmul %78, %2, %cst_41 {dimension_numbers = #tpu.dot_dimension_numbers<[1], [0], [0], [1], [0, 0, 1, 1], [], []>} : vector<16x64xbf16>, vector<64x64xbf16>, vector<16x64xf32> -> vector<16x64xf32>
    %80 = vector.broadcast %11 : vector<1x64xf32> to vector<16x64xf32>
    %81 = arith.addf %79, %80 : vector<16x64xf32>
    %82 = arith.addf %52, %81 : vector<16x64xf32>
    %cst_42 = arith.constant dense<0.000000e+00> : vector<16xf32>
    %83 = vector.multi_reduction <add>, %82, %cst_42 [1] : vector<16x64xf32> to vector<16xf32>
    %84 = vector.shape_cast %83 : vector<16xf32> to vector<16x1xf32>
    %cst_43 = arith.constant 6.400000e+01 : f32
    %85 = vector.broadcast %cst_43 : f32 to vector<16x1xf32>
    %86 = arith.divf %84, %85 : vector<16x1xf32>
    %87 = vector.broadcast %86 : vector<16x1xf32> to vector<16x64xf32>
    %88 = arith.subf %82, %87 : vector<16x64xf32>
    %89 = arith.mulf %88, %88 : vector<16x64xf32>
    %cst_44 = arith.constant dense<0.000000e+00> : vector<16xf32>
    %90 = vector.multi_reduction <add>, %89, %cst_44 [1] : vector<16x64xf32> to vector<16xf32>
    %91 = vector.shape_cast %90 : vector<16xf32> to vector<16x1xf32>
    %cst_45 = arith.constant 6.400000e+01 : f32
    %92 = vector.broadcast %cst_45 : f32 to vector<16x1xf32>
    %93 = arith.divf %91, %92 : vector<16x1xf32>
    %94 = vector.broadcast %86 : vector<16x1xf32> to vector<16x64xf32>
    %95 = arith.subf %82, %94 : vector<16x64xf32>
    %cst_46 = arith.constant 9.99999996E-13 : f32
    %96 = vector.broadcast %cst_46 : f32 to vector<16x1xf32>
    %97 = arith.addf %93, %96 : vector<16x1xf32>
    %98 = math.rsqrt %97 : vector<16x1xf32>
    %99 = vector.broadcast %98 : vector<16x1xf32> to vector<16x64xf32>
    %100 = arith.mulf %95, %99 : vector<16x64xf32>
    %101 = vector.broadcast %12 : vector<1x64xf32> to vector<16x64xf32>
    %102 = arith.mulf %100, %101 : vector<16x64xf32>
    %103 = vector.broadcast %13 : vector<1x64xf32> to vector<16x64xf32>
    %104 = arith.addf %102, %103 : vector<16x64xf32>
    %105 = arith.truncf %104 : vector<16x64xf32> to vector<16x64xbf16>
    %cst_47 = arith.constant dense<0.000000e+00> : vector<16x128xf32>
    %106 = tpu.matmul %105, %3, %cst_47 {dimension_numbers = #tpu.dot_dimension_numbers<[1], [0], [0], [1], [0, 0, 1, 1], [], []>} : vector<16x64xbf16>, vector<64x128xbf16>, vector<16x128xf32> -> vector<16x128xf32>
    %107 = vector.broadcast %14 : vector<1x128xf32> to vector<16x128xf32>
    %108 = arith.addf %106, %107 : vector<16x128xf32>
    %cst_48 = arith.constant 5.000000e-01 : f32
    %109 = vector.broadcast %cst_48 : f32 to vector<16x128xf32>
    %110 = arith.mulf %109, %108 : vector<16x128xf32>
    %cst_49 = arith.constant 4.471500e-02 : f32
    %111 = vector.broadcast %cst_49 : f32 to vector<16x128xf32>
    %112 = arith.mulf %111, %108 : vector<16x128xf32>
    %113 = arith.mulf %112, %108 : vector<16x128xf32>
    %114 = arith.mulf %113, %108 : vector<16x128xf32>
    %115 = arith.addf %108, %114 : vector<16x128xf32>
    %cst_50 = arith.constant 0.797884583 : f32
    %116 = vector.broadcast %cst_50 : f32 to vector<16x128xf32>
    %117 = arith.mulf %116, %115 : vector<16x128xf32>
    %118 = math.tanh %117 : vector<16x128xf32>
    %cst_51 = arith.constant 1.000000e+00 : f32
    %119 = vector.broadcast %cst_51 : f32 to vector<16x128xf32>
    %120 = arith.addf %119, %118 : vector<16x128xf32>
    %121 = arith.mulf %110, %120 : vector<16x128xf32>
    %122 = arith.truncf %121 : vector<16x128xf32> to vector<16x128xbf16>
    %cst_52 = arith.constant dense<0.000000e+00> : vector<16x64xf32>
    %123 = tpu.matmul %122, %4, %cst_52 {dimension_numbers = #tpu.dot_dimension_numbers<[1], [0], [0], [1], [0, 0, 1, 1], [], []>} : vector<16x128xbf16>, vector<128x64xbf16>, vector<16x64xf32> -> vector<16x64xf32>
    %124 = vector.broadcast %15 : vector<1x64xf32> to vector<16x64xf32>
    %125 = arith.addf %123, %124 : vector<16x64xf32>
    %126 = arith.addf %104, %125 : vector<16x64xf32>
    %cst_53 = arith.constant dense<0.000000e+00> : vector<16xf32>
    %127 = vector.multi_reduction <add>, %126, %cst_53 [1] : vector<16x64xf32> to vector<16xf32>
    %128 = vector.shape_cast %127 : vector<16xf32> to vector<16x1xf32>
    %cst_54 = arith.constant 6.400000e+01 : f32
    %129 = vector.broadcast %cst_54 : f32 to vector<16x1xf32>
    %130 = arith.divf %128, %129 : vector<16x1xf32>
    %131 = vector.broadcast %130 : vector<16x1xf32> to vector<16x64xf32>
    %132 = arith.subf %126, %131 : vector<16x64xf32>
    %133 = arith.mulf %132, %132 : vector<16x64xf32>
    %cst_55 = arith.constant dense<0.000000e+00> : vector<16xf32>
    %134 = vector.multi_reduction <add>, %133, %cst_55 [1] : vector<16x64xf32> to vector<16xf32>
    %135 = vector.shape_cast %134 : vector<16xf32> to vector<16x1xf32>
    %cst_56 = arith.constant 6.400000e+01 : f32
    %136 = vector.broadcast %cst_56 : f32 to vector<16x1xf32>
    %137 = arith.divf %135, %136 : vector<16x1xf32>
    %138 = vector.broadcast %130 : vector<16x1xf32> to vector<16x64xf32>
    %139 = arith.subf %126, %138 : vector<16x64xf32>
    %cst_57 = arith.constant 9.99999996E-13 : f32
    %140 = vector.broadcast %cst_57 : f32 to vector<16x1xf32>
    %141 = arith.addf %137, %140 : vector<16x1xf32>
    %142 = math.rsqrt %141 : vector<16x1xf32>
    %143 = vector.broadcast %142 : vector<16x1xf32> to vector<16x64xf32>
    %144 = arith.mulf %139, %143 : vector<16x64xf32>
    %145 = vector.broadcast %16 : vector<1x64xf32> to vector<16x64xf32>
    %146 = arith.mulf %144, %145 : vector<16x64xf32>
    %147 = vector.broadcast %17 : vector<1x64xf32> to vector<16x64xf32>
    %148 = arith.addf %146, %147 : vector<16x64xf32>
    %149 = arith.truncf %148 : vector<16x64xf32> to vector<16x64xbf16>
    %cst_58 = arith.constant dense<0.000000e+00> : vector<16x192xf32>
    %150 = tpu.matmul %149, %1, %cst_58 {dimension_numbers = #tpu.dot_dimension_numbers<[1], [0], [0], [1], [0, 0, 1, 1], [], []>} : vector<16x64xbf16>, vector<64x192xbf16>, vector<16x192xf32> -> vector<16x192xf32>
    %151 = vector.broadcast %10 : vector<1x192xf32> to vector<16x192xf32>
    %152 = arith.addf %150, %151 : vector<16x192xf32>
    %153 = vector.extract_strided_slice %152 {offsets = [0, 0], sizes = [16, 64], strides = [1, 1]} : vector<16x192xf32> to vector<16x64xf32>
    %154 = vector.extract_strided_slice %152 {offsets = [0, 64], sizes = [16, 64], strides = [1, 1]} : vector<16x192xf32> to vector<16x64xf32>
    %155 = vector.extract_strided_slice %152 {offsets = [0, 128], sizes = [16, 64], strides = [1, 1]} : vector<16x192xf32> to vector<16x64xf32>
    %156 = tpu.concatenate %154, %154, %154, %154 in 0 : vector<16x64xf32>, vector<16x64xf32>, vector<16x64xf32>, vector<16x64xf32> -> vector<64x64xf32>
    %157 = arith.mulf %156, %20 : vector<64x64xf32>
    %158 = tpu.concatenate %155, %155, %155, %155 in 0 : vector<16x64xf32>, vector<16x64xf32>, vector<16x64xf32>, vector<16x64xf32> -> vector<64x64xf32>
    %159 = arith.mulf %158, %20 : vector<64x64xf32>
    %160 = arith.truncf %153 : vector<16x64xf32> to vector<16x64xbf16>
    %161 = arith.truncf %157 : vector<64x64xf32> to vector<64x64xbf16>
    %cst_59 = arith.constant dense<0.000000e+00> : vector<16x64xf32>
    %162 = tpu.matmul %160, %161, %cst_59 {dimension_numbers = #tpu.dot_dimension_numbers<[1], [1], [0], [0], [0, 0, 1, 0], [], []>} : vector<16x64xbf16>, vector<64x64xbf16>, vector<16x64xf32> -> vector<16x64xf32>
    %163 = arith.addf %162, %24 : vector<16x64xf32>
    %cst_60 = arith.constant dense<0xFF800000> : vector<16xf32>
    %164 = vector.multi_reduction <maximumf>, %163, %cst_60 [1] : vector<16x64xf32> to vector<16xf32>
    %165 = vector.shape_cast %164 : vector<16xf32> to vector<16x1xf32>
    %166 = vector.broadcast %165 : vector<16x1xf32> to vector<16x64xf32>
    %167 = arith.subf %163, %166 : vector<16x64xf32>
    %168 = math.exp %167 : vector<16x64xf32>
    %cst_61 = arith.constant dense<0.000000e+00> : vector<16x64xf32>
    %169 = tpu.matmul %168, %21, %cst_61 {dimension_numbers = #tpu.dot_dimension_numbers<[1], [0], [0], [1], [0, 0, 1, 1], [], []>} : vector<16x64xf32>, vector<64x64xf32>, vector<16x64xf32> -> vector<16x64xf32>
    %170 = arith.divf %168, %169 : vector<16x64xf32>
    %171 = arith.truncf %170 : vector<16x64xf32> to vector<16x64xbf16>
    %172 = arith.truncf %159 : vector<64x64xf32> to vector<64x64xbf16>
    %cst_62 = arith.constant dense<0.000000e+00> : vector<16x64xf32>
    %173 = tpu.matmul %171, %172, %cst_62 {dimension_numbers = #tpu.dot_dimension_numbers<[1], [0], [0], [1], [0, 0, 1, 1], [], []>} : vector<16x64xbf16>, vector<64x64xbf16>, vector<16x64xf32> -> vector<16x64xf32>
    %174 = arith.truncf %173 : vector<16x64xf32> to vector<16x64xbf16>
    %cst_63 = arith.constant dense<0.000000e+00> : vector<16x64xf32>
    %175 = tpu.matmul %174, %2, %cst_63 {dimension_numbers = #tpu.dot_dimension_numbers<[1], [0], [0], [1], [0, 0, 1, 1], [], []>} : vector<16x64xbf16>, vector<64x64xbf16>, vector<16x64xf32> -> vector<16x64xf32>
    %176 = vector.broadcast %11 : vector<1x64xf32> to vector<16x64xf32>
    %177 = arith.addf %175, %176 : vector<16x64xf32>
    %178 = arith.addf %148, %177 : vector<16x64xf32>
    %cst_64 = arith.constant dense<0.000000e+00> : vector<16xf32>
    %179 = vector.multi_reduction <add>, %178, %cst_64 [1] : vector<16x64xf32> to vector<16xf32>
    %180 = vector.shape_cast %179 : vector<16xf32> to vector<16x1xf32>
    %cst_65 = arith.constant 6.400000e+01 : f32
    %181 = vector.broadcast %cst_65 : f32 to vector<16x1xf32>
    %182 = arith.divf %180, %181 : vector<16x1xf32>
    %183 = vector.broadcast %182 : vector<16x1xf32> to vector<16x64xf32>
    %184 = arith.subf %178, %183 : vector<16x64xf32>
    %185 = arith.mulf %184, %184 : vector<16x64xf32>
    %cst_66 = arith.constant dense<0.000000e+00> : vector<16xf32>
    %186 = vector.multi_reduction <add>, %185, %cst_66 [1] : vector<16x64xf32> to vector<16xf32>
    %187 = vector.shape_cast %186 : vector<16xf32> to vector<16x1xf32>
    %cst_67 = arith.constant 6.400000e+01 : f32
    %188 = vector.broadcast %cst_67 : f32 to vector<16x1xf32>
    %189 = arith.divf %187, %188 : vector<16x1xf32>
    %190 = vector.broadcast %182 : vector<16x1xf32> to vector<16x64xf32>
    %191 = arith.subf %178, %190 : vector<16x64xf32>
    %cst_68 = arith.constant 9.99999996E-13 : f32
    %192 = vector.broadcast %cst_68 : f32 to vector<16x1xf32>
    %193 = arith.addf %189, %192 : vector<16x1xf32>
    %194 = math.rsqrt %193 : vector<16x1xf32>
    %195 = vector.broadcast %194 : vector<16x1xf32> to vector<16x64xf32>
    %196 = arith.mulf %191, %195 : vector<16x64xf32>
    %197 = vector.broadcast %12 : vector<1x64xf32> to vector<16x64xf32>
    %198 = arith.mulf %196, %197 : vector<16x64xf32>
    %199 = vector.broadcast %13 : vector<1x64xf32> to vector<16x64xf32>
    %200 = arith.addf %198, %199 : vector<16x64xf32>
    %201 = arith.truncf %200 : vector<16x64xf32> to vector<16x64xbf16>
    %cst_69 = arith.constant dense<0.000000e+00> : vector<16x128xf32>
    %202 = tpu.matmul %201, %3, %cst_69 {dimension_numbers = #tpu.dot_dimension_numbers<[1], [0], [0], [1], [0, 0, 1, 1], [], []>} : vector<16x64xbf16>, vector<64x128xbf16>, vector<16x128xf32> -> vector<16x128xf32>
    %203 = vector.broadcast %14 : vector<1x128xf32> to vector<16x128xf32>
    %204 = arith.addf %202, %203 : vector<16x128xf32>
    %cst_70 = arith.constant 5.000000e-01 : f32
    %205 = vector.broadcast %cst_70 : f32 to vector<16x128xf32>
    %206 = arith.mulf %205, %204 : vector<16x128xf32>
    %cst_71 = arith.constant 4.471500e-02 : f32
    %207 = vector.broadcast %cst_71 : f32 to vector<16x128xf32>
    %208 = arith.mulf %207, %204 : vector<16x128xf32>
    %209 = arith.mulf %208, %204 : vector<16x128xf32>
    %210 = arith.mulf %209, %204 : vector<16x128xf32>
    %211 = arith.addf %204, %210 : vector<16x128xf32>
    %cst_72 = arith.constant 0.797884583 : f32
    %212 = vector.broadcast %cst_72 : f32 to vector<16x128xf32>
    %213 = arith.mulf %212, %211 : vector<16x128xf32>
    %214 = math.tanh %213 : vector<16x128xf32>
    %cst_73 = arith.constant 1.000000e+00 : f32
    %215 = vector.broadcast %cst_73 : f32 to vector<16x128xf32>
    %216 = arith.addf %215, %214 : vector<16x128xf32>
    %217 = arith.mulf %206, %216 : vector<16x128xf32>
    %218 = arith.truncf %217 : vector<16x128xf32> to vector<16x128xbf16>
    %cst_74 = arith.constant dense<0.000000e+00> : vector<16x64xf32>
    %219 = tpu.matmul %218, %4, %cst_74 {dimension_numbers = #tpu.dot_dimension_numbers<[1], [0], [0], [1], [0, 0, 1, 1], [], []>} : vector<16x128xbf16>, vector<128x64xbf16>, vector<16x64xf32> -> vector<16x64xf32>
    %220 = vector.broadcast %15 : vector<1x64xf32> to vector<16x64xf32>
    %221 = arith.addf %219, %220 : vector<16x64xf32>
    %222 = arith.addf %200, %221 : vector<16x64xf32>
    %cst_75 = arith.constant dense<0.000000e+00> : vector<16xf32>
    %223 = vector.multi_reduction <add>, %222, %cst_75 [1] : vector<16x64xf32> to vector<16xf32>
    %224 = vector.shape_cast %223 : vector<16xf32> to vector<16x1xf32>
    %cst_76 = arith.constant 6.400000e+01 : f32
    %225 = vector.broadcast %cst_76 : f32 to vector<16x1xf32>
    %226 = arith.divf %224, %225 : vector<16x1xf32>
    %227 = vector.broadcast %226 : vector<16x1xf32> to vector<16x64xf32>
    %228 = arith.subf %222, %227 : vector<16x64xf32>
    %229 = arith.mulf %228, %228 : vector<16x64xf32>
    %cst_77 = arith.constant dense<0.000000e+00> : vector<16xf32>
    %230 = vector.multi_reduction <add>, %229, %cst_77 [1] : vector<16x64xf32> to vector<16xf32>
    %231 = vector.shape_cast %230 : vector<16xf32> to vector<16x1xf32>
    %cst_78 = arith.constant 6.400000e+01 : f32
    %232 = vector.broadcast %cst_78 : f32 to vector<16x1xf32>
    %233 = arith.divf %231, %232 : vector<16x1xf32>
    %234 = vector.broadcast %226 : vector<16x1xf32> to vector<16x64xf32>
    %235 = arith.subf %222, %234 : vector<16x64xf32>
    %cst_79 = arith.constant 9.99999996E-13 : f32
    %236 = vector.broadcast %cst_79 : f32 to vector<16x1xf32>
    %237 = arith.addf %233, %236 : vector<16x1xf32>
    %238 = math.rsqrt %237 : vector<16x1xf32>
    %239 = vector.broadcast %238 : vector<16x1xf32> to vector<16x64xf32>
    %240 = arith.mulf %235, %239 : vector<16x64xf32>
    %241 = vector.broadcast %16 : vector<1x64xf32> to vector<16x64xf32>
    %242 = arith.mulf %240, %241 : vector<16x64xf32>
    %243 = vector.broadcast %17 : vector<1x64xf32> to vector<16x64xf32>
    %244 = arith.addf %242, %243 : vector<16x64xf32>
    %cst_80 = arith.constant dense<0.000000e+00> : vector<2x64xf32>
    %245 = tpu.matmul %22, %244, %cst_80 {dimension_numbers = #tpu.dot_dimension_numbers<[1], [0], [0], [1], [0, 0, 1, 1], [], []>} : vector<2x16xf32>, vector<16x64xf32>, vector<2x64xf32> -> vector<2x64xf32>
    %246 = arith.truncf %245 : vector<2x64xf32> to vector<2x64xbf16>
    %cst_81 = arith.constant dense<0.000000e+00> : vector<2x64xf32>
    %247 = tpu.matmul %246, %5, %cst_81 {dimension_numbers = #tpu.dot_dimension_numbers<[1], [0], [0], [1], [0, 0, 1, 1], [], []>} : vector<2x64xbf16>, vector<64x64xbf16>, vector<2x64xf32> -> vector<2x64xf32>
    %248 = vector.broadcast %18 : vector<1x64xf32> to vector<2x64xf32>
    %249 = arith.addf %247, %248 : vector<2x64xf32>
    %250 = math.tanh %249 : vector<2x64xf32>
    %251 = arith.truncf %250 : vector<2x64xf32> to vector<2x64xbf16>
    %cst_82 = arith.constant dense<0.000000e+00> : vector<2x128xf32>
    %252 = tpu.matmul %251, %6, %cst_82 {dimension_numbers = #tpu.dot_dimension_numbers<[1], [0], [0], [1], [0, 0, 1, 1], [], []>} : vector<2x64xbf16>, vector<64x128xbf16>, vector<2x128xf32> -> vector<2x128xf32>
    %253 = vector.broadcast %19 : vector<1x128xf32> to vector<2x128xf32>
    %254 = arith.addf %252, %253 : vector<2x128xf32>
    %c0_83 = arith.constant 0 : index
    %c0_84 = arith.constant 0 : index
    %c0_85 = arith.constant 0 : index
    %255 = vector.load %arg6[%c0_83, %c0_84, %c0_85] : memref<1x2x128xf32, #tpu.memory_space<vmem>>, vector<1x2x128xf32>
    %256 = vector.shape_cast %255 : vector<1x2x128xf32> to vector<2x128xf32>
    %257 = vector.shape_cast %254 : vector<2x128xf32> to vector<1x2x128xf32>
    tpu.vector_store %arg6[%c0_83, %c0_84, %c0_85], %257 {strides = array<i32>} : memref<1x2x128xf32, #tpu.memory_space<vmem>>, vector<1x2x128xf32>,
    return
  }
  func.func @transform_0(%arg0: i32) -> (i32, i32, i32) {
    %c0_i32 = arith.constant 0 : i32
    %c0_i32_0 = arith.constant 0 : i32
    %c0_i32_1 = arith.constant 0 : i32
    return %arg0, %c0_i32, %c0_i32_0 : i32, i32, i32
  }
  func.func @transform_1(%arg0: i32) -> (i32, i32, i32) {
    %c0_i32 = arith.constant 0 : i32
    %c0_i32_0 = arith.constant 0 : i32
    %c0_i32_1 = arith.constant 0 : i32
    return %arg0, %c0_i32, %c0_i32_0 : i32, i32, i32
  }
  func.func @transform_2(%arg0: i32) -> (i32, i32) {
    %c0_i32 = arith.constant 0 : i32
    %c0_i32_0 = arith.constant 0 : i32
    %c0_i32_1 = arith.constant 0 : i32
    return %c0_i32, %c0_i32_0 : i32, i32
  }
  func.func @transform_3(%arg0: i32) -> (i32, i32) {
    %c0_i32 = arith.constant 0 : i32
    %c0_i32_0 = arith.constant 0 : i32
    %c0_i32_1 = arith.constant 0 : i32
    return %c0_i32, %c0_i32_0 : i32, i32
  }
  func.func @transform_4(%arg0: i32) -> (i32, i32) {
    %c0_i32 = arith.constant 0 : i32
    %c0_i32_0 = arith.constant 0 : i32
    %c0_i32_1 = arith.constant 0 : i32
    return %c0_i32, %c0_i32_0 : i32, i32
  }
  func.func @transform_5(%arg0: i32) -> (i32, i32, i32) {
    %c0_i32 = arith.constant 0 : i32
    %c0_i32_0 = arith.constant 0 : i32
    %c0_i32_1 = arith.constant 0 : i32
    return %arg0, %c0_i32, %c0_i32_0 : i32, i32, i32
  }
}

</mosaic_0001>

<llo_original>
// kernel: mul.21
$region0: #{mul.21}
  %s0 = inlined_call_operand.vmem [shape: f32[4,8], index: 0, kind: input, shape index: {}]
  %s1 = inlined_call_operand.vmem [shape: f32[2,16], index: 1, kind: output, shape index: {}]
  $region1: #{mul.21} parent=0
    #allocation0 [shape = 'u8[4096]{0}', space=vmem, size = 0x1000, scoped, tag = 'scoped mem for output reshape']
    #allocation1 [shape = 'u8[4096]{0}', space=vmem, size = 0x1000, scoped, tag = 'scoped mem for input reshape']
    %s3 = sshll.u32 1, 4
    %s4 = ssub.s32 %s3, 1
    %v5 = vld [vmem:[%s0] sm:%s4]
    %6 = vst [vmem:[#allocation1] sm:%s4] %v5
    %s7 = smov 3
    %v8 = vld [vmem:[#allocation1] ss:$2 sm:%s7]
    %vm9 = vcmask 64512
    %10 = vst.msk [vmem:[#allocation0] sm:$0x3] %vm9, %v8
    %s11 = scalar_lea.vmem [#allocation1], 1
    %s12 = smov 3
    %v13 = vld [vmem:[%s11] ss:$2 sm:%s12]
    %14 = vrot.lane.b32.xlu0 %v13, 8
    %v15 = vpop.permute.xlu0 %14
    %vm16 = vcmask 130112
    %17 = vst.msk [vmem:[#allocation0] sm:$0x3] %vm16, %v15
    %s19 = sshll.u32 1, 2
    %s20 = ssub.s32 %s19, 1
    %v22 = vld [vmem:[#allocation0] sm:%s20]
    %s23 = sshll.u32 1, 2
    %s24 = ssub.s32 %s23, 1
    %25 = vst [vmem:[%s1] sm:%s24] %v22

// kernel: tile.9
$region0: #{tile.9}
  %s0 = inlined_call_operand.vmem [shape: f32[2,16,4,16], index: 0, kind: input, shape index: {}]
  %s1 = inlined_call_operand.vmem [shape: f32[2,16,64], index: 1, kind: output, shape index: {}]
  $region1: #{tile.9} parent=0
    #allocation0 [shape = 'u8[131072]{0}', space=vmem, size = 0x20000, scoped, tag = 'scoped mem for input reshape']
    %s3 = sshll.u32 1, 4
    %s4 = ssub.s32 %s3, 1
    %s5 = smul.addr 4, 31
    %s6 = scalar_lea.vmem %s0, %s5
    %v7 = vld [vmem:[%s6] sm:%s4]
    %s8 = scalar_lea.vmem [#allocation0], 248
    %9 = vst [vmem:[%s8] sm:%s4] %v7
    %s10 = smul.addr 4, 30
    %s11 = scalar_lea.vmem %s0, %s10
    %v12 = vld [vmem:[%s11] sm:%s4]
    %s13 = scalar_lea.vmem [#allocation0], 240
    %14 = vst [vmem:[%s13] sm:%s4] %v12
    %s15 = smul.addr 4, 29
    %s16 = scalar_lea.vmem %s0, %s15
    %v17 = vld [vmem:[%s16] sm:%s4]
    %s18 = scalar_lea.vmem [#allocation0], 232
    %19 = vst [vmem:[%s18] sm:%s4] %v17
    %s20 = smul.addr 4, 28
    %s21 = scalar_lea.vmem %s0, %s20
    %v22 = vld [vmem:[%s21] sm:%s4]
    %s23 = scalar_lea.vmem [#allocation0], 224
    %24 = vst [vmem:[%s23] sm:%s4] %v22
    %s25 = smul.addr 4, 27
    %s26 = scalar_lea.vmem %s0, %s25
    %v27 = vld [vmem:[%s26] sm:%s4]
    %s28 = scalar_lea.vmem [#allocation0], 216
    %29 = vst [vmem:[%s28] sm:%s4] %v27
    %s30 = smul.addr 4, 26
    %s31 = scalar_lea.vmem %s0, %s30
    %v32 = vld [vmem:[%s31] sm:%s4]
    %s33 = scalar_lea.vmem [#allocation0], 208
    %34 = vst [vmem:[%s33] sm:%s4] %v32
    %s35 = smul.addr 4, 25
    %s36 = scalar_lea.vmem %s0, %s35
    %v37 = vld [vmem:[%s36] sm:%s4]
    %s38 = scalar_lea.vmem [#allocation0], 200
    %39 = vst [vmem:[%s38] sm:%s4] %v37
    %s40 = smul.addr 4, 24
    %s41 = scalar_lea.vmem %s0, %s40
    %v42 = vld [vmem:[%s41] sm:%s4]
    %s43 = scalar_lea.vmem [#allocation0], 192
    %44 = vst [vmem:[%s43] sm:%s4] %v42
    %s45 = smul.addr 4, 23
    %s46 = scalar_lea.vmem %s0, %s45
    %v47 = vld [vmem:[%s46] sm:%s4]
    %s48 = scalar_lea.vmem [#allocation0], 184
    %49 = vst [vmem:[%s48] sm:%s4] %v47
    %s50 = smul.addr 4, 22
    %s51 = scalar_lea.vmem %s0, %s50
    %v52 = vld [vmem:[%s51] sm:%s4]
    %s53 = scalar_lea.vmem [#allocation0], 176
    %54 = vst [vmem:[%s53] sm:%s4] %v52
    %s55 = smul.addr 4, 21
    %s56 = scalar_lea.vmem %s0, %s55
    %v57 = vld [vmem:[%s56] sm:%s4]
    %s58 = scalar_lea.vmem [#allocation0], 168
    %59 = vst [vmem:[%s58] sm:%s4] %v57
    %s60 = smul.addr 4, 20
    %s61 = scalar_lea.vmem %s0, %s60
    %v62 = vld [vmem:[%s61] sm:%s4]
    %s63 = scalar_lea.vmem [#allocation0], 160
    %64 = vst [vmem:[%s63] sm:%s4] %v62
    %s65 = smul.addr 4, 19
    %s66 = scalar_lea.vmem %s0, %s65
    %v67 = vld [vmem:[%s66] sm:%s4]
    %s68 = scalar_lea.vmem [#allocation0], 152
    %69 = vst [vmem:[%s68] sm:%s4] %v67
    %s70 = smul.addr 4, 18
    %s71 = scalar_lea.vmem %s0, %s70
    %v72 = vld [vmem:[%s71] sm:%s4]
    %s73 = scalar_lea.vmem [#allocation0], 144
    %74 = vst [vmem:[%s73] sm:%s4] %v72
    %s75 = smul.addr 4, 17
    %s76 = scalar_lea.vmem %s0, %s75
    %v77 = vld [vmem:[%s76] sm:%s4]
    %s78 = scalar_lea.vmem [#allocation0], 136
    %79 = vst [vmem:[%s78] sm:%s4] %v77
    %s80 = smul.addr 4, 16
    %s81 = scalar_lea.vmem %s0, %s80
    %v82 = vld [vmem:[%s81] sm:%s4]
    %s83 = scalar_lea.vmem [#allocation0], 128
    %84 = vst [vmem:[%s83] sm:%s4] %v82
    %s85 = smul.addr 4, 15
    %s86 = scalar_lea.vmem %s0, %s85
    %v87 = vld [vmem:[%s86] sm:%s4]
    %s88 = scalar_lea.vmem [#allocation0], 120
    %89 = vst [vmem:[%s88] sm:%s4] %v87
    %s90 = smul.addr 4, 14
    %s91 = scalar_lea.vmem %s0, %s90
    %v92 = vld [vmem:[%s91] sm:%s4]
    %s93 = scalar_lea.vmem [#allocation0], 112
    %94 = vst [vmem:[%s93] sm:%s4] %v92
    %s95 = smul.addr 4, 13
    %s96 = scalar_lea.vmem %s0, %s95
    %v97 = vld [vmem:[%s96] sm:%s4]
    %s98 = scalar_lea.vmem [#allocation0], 104
    %99 = vst [vmem:[%s98] sm:%s4] %v97
    %s100 = smul.addr 4, 12
    %s101 = scalar_lea.vmem %s0, %s100
    %v102 = vld [vmem:[%s101] sm:%s4]
    %s103 = scalar_lea.vmem [#allocation0], 96
    %104 = vst [vmem:[%s103] sm:%s4] %v102
    %s105 = smul.addr 4, 11
    %s106 = scalar_lea.vmem %s0, %s105
    %v107 = vld [vmem:[%s106] sm:%s4]
    %s108 = scalar_lea.vmem [#allocation0], 88
    %109 = vst [vmem:[%s108] sm:%s4] %v107
    %s110 = smul.addr 4, 10
    %s111 = scalar_lea.vmem %s0, %s110
    %v112 = vld [vmem:[%s111] sm:%s4]
    %s113 = scalar_lea.vmem [#allocation0], 80
    %114 = vst [vmem:[%s113] sm:%s4] %v112
    %s115 = smul.addr 4, 9
    %s116 = scalar_lea.vmem %s0, %s115
    %v117 = vld [vmem:[%s116] sm:%s4]
    %s118 = scalar_lea.vmem [#allocation0], 72
    %119 = vst [vmem:[%s118] sm:%s4] %v117
    %s120 = smul.addr 4, 8
    %s121 = scalar_lea.vmem %s0, %s120
    %v122 = vld [vmem:[%s121] sm:%s4]
    %s123 = scalar_lea.vmem [#allocation0], 64
    %124 = vst [vmem:[%s123] sm:%s4] %v122
    %s125 = smul.addr 4, 7
    %s126 = scalar_lea.vmem %s0, %s125
    %v127 = vld [vmem:[%s126] sm:%s4]
    %s128 = scalar_lea.vmem [#allocation0], 56
    %129 = vst [vmem:[%s128] sm:%s4] %v127
    %s130 = smul.addr 4, 6
    %s131 = scalar_lea.vmem %s0, %s130
    %v132 = vld [vmem:[%s131] sm:%s4]
    %s133 = scalar_lea.vmem [#allocation0], 48
    %134 = vst [vmem:[%s133] sm:%s4] %v132
    %s135 = smul.addr 4, 5
    %s136 = scalar_lea.vmem %s0, %s135
    %v137 = vld [vmem:[%s136] sm:%s4]
    %s138 = scalar_lea.vmem [#allocation0], 40
    %139 = vst [vmem:[%s138] sm:%s4] %v137
    %s140 = smul.addr 4, 4
    %s141 = scalar_lea.vmem %s0, %s140
    %v142 = vld [vmem:[%s141] sm:%s4]
    %s143 = scalar_lea.vmem [#allocation0], 32
    %144 = vst [vmem:[%s143] sm:%s4] %v142
    %s145 = smul.addr 4, 3
    %s146 = scalar_lea.vmem %s0, %s145
    %v147 = vld [vmem:[%s146] sm:%s4]
    %s148 = scalar_lea.vmem [#allocation0], 24
    %149 = vst [vmem:[%s148] sm:%s4] %v147
    %s150 = smul.addr 4, 2
    %s151 = scalar_lea.vmem %s0, %s150
    %v152 = vld [vmem:[%s151] sm:%s4]
    %s153 = scalar_lea.vmem [#allocation0], 16
    %154 = vst [vmem:[%s153] sm:%s4] %v152
    %s155 = scalar_lea.vmem %s0, 4
    %v156 = vld [vmem:[%s155] sm:%s4]
    %s157 = scalar_lea.vmem [#allocation0], 8
    %158 = vst [vmem:[%s157] sm:%s4] %v156
    %v159 = vld [vmem:[%s0] sm:%s4]
    %160 = vst [vmem:[#allocation0] sm:%s4] %v159
    %v161 = vld [vmem:[#allocation0] ss:$8 sm:$0xf]
    %v162 = vld [vmem:[#allocation0] ss:$8 sm:$0xf0]
    %vm163 = vcmask 1047556
    %v164 = vsel %vm163, %v162, %v161
    %vm165 = vcmask 130048
    %166 = vst.msk [vmem:[%s1] sm:$0xff] %vm165, %v164
    %s167 = scalar_lea.vmem [#allocation0], 64
    %v168 = vld [vmem:[%s167] ss:$8 sm:$0xf]
    %s169 = scalar_lea.vmem [#allocation0], 64
    %v170 = vld [vmem:[%s169] ss:$8 sm:$0xf0]
    %vm171 = vcmask 1047556
    %v172 = vsel %vm171, %v170, %v168
    %vm173 = vcmask 130048
    %s174 = scalar_lea.vmem %s1, 8
    %175 = vst.msk [vmem:[%s174] sm:$0xff] %vm173, %v172
    %s176 = scalar_lea.vmem [#allocation0], 128
    %v177 = vld [vmem:[%s176] ss:$8 sm:$0xf]
    %s178 = scalar_lea.vmem [#allocation0], 128
    %v179 = vld [vmem:[%s178] ss:$8 sm:$0xf0]
    %vm180 = vcmask 1047556
    %v181 = vsel %vm180, %v179, %v177
    %vm182 = vcmask 130048
    %s183 = scalar_lea.vmem %s1, 16
    %184 = vst.msk [vmem:[%s183] sm:$0xff] %vm182, %v181
    %s185 = scalar_lea.vmem [#allocation0], 192
    %v186 = vld [vmem:[%s185] ss:$8 sm:$0xf]
    %s187 = scalar_lea.vmem [#allocation0], 192
    %v188 = vld [vmem:[%s187] ss:$8 sm:$0xf0]
    %vm189 = vcmask 1047556
    %v190 = vsel %vm189, %v188, %v186
    %vm191 = vcmask 130048
    %s192 = scalar_lea.vmem %s1, 24
    %193 = vst.msk [vmem:[%s192] sm:$0xff] %vm191, %v190
    %s194 = scalar_lea.vmem [#allocation0], 3
    %v195 = vld [vmem:[%s194] ss:$8 sm:$0xf]
    %s196 = scalar_lea.vmem [#allocation0], 3
    %v197 = vld [vmem:[%s196] ss:$8 sm:$0xf0]
    %vm198 = vcmask 1047556
    %v199 = vsel %vm198, %v197, %v195
    %200 = vrot.lane.b32.xlu0 %v199, 48
    %v201 = vpop.permute.xlu0 %200
    %vm202 = vcmask 523648
    %203 = vst.msk [vmem:[%s1] sm:$0xff] %vm202, %v201
    %s204 = scalar_lea.vmem [#allocation0], 67
    %v205 = vld [vmem:[%s204] ss:$8 sm:$0xf]
    %s206 = scalar_lea.vmem [#allocation0], 67
    %v207 = vld [vmem:[%s206] ss:$8 sm:$0xf0]
    %vm208 = vcmask 1047556
    %v209 = vsel %vm208, %v207, %v205
    %210 = vrot.lane.b32.xlu0 %v209, 48
    %v211 = vpop.permute.xlu0 %210
    %vm212 = vcmask 523648
    %s213 = scalar_lea.vmem %s1, 8
    %214 = vst.msk [vmem:[%s213] sm:$0xff] %vm212, %v211
    %s215 = scalar_lea.vmem [#allocation0], 131
    %v216 = vld [vmem:[%s215] ss:$8 sm:$0xf]
    %s217 = scalar_lea.vmem [#allocation0], 131
    %v218 = vld [vmem:[%s217] ss:$8 sm:$0xf0]
    %vm219 = vcmask 1047556
    %v220 = vsel %vm219, %v218, %v216
    %221 = vrot.lane.b32.xlu0 %v220, 48
    %v222 = vpop.permute.xlu0 %221
    %vm223 = vcmask 523648
    %s224 = scalar_lea.vmem %s1, 16
    %225 = vst.msk [vmem:[%s224] sm:$0xff] %vm223, %v222
    %s226 = scalar_lea.vmem [#allocation0], 195
    %v227 = vld [vmem:[%s226] ss:$8 sm:$0xf]
    %s228 = scalar_lea.vmem [#allocation0], 195
    %v229 = vld [vmem:[%s228] ss:$8 sm:$0xf0]
    %vm230 = vcmask 1047556
    %v231 = vsel %vm230, %v229, %v227
    %232 = vrot.lane.b32.xlu0 %v231, 48
    %v233 = vpop.permute.xlu0 %232
    %vm234 = vcmask 523648
    %s235 = scalar_lea.vmem %s1, 24
    %236 = vst.msk [vmem:[%s235] sm:$0xff] %vm234, %v233
    %s237 = scalar_lea.vmem [#allocation0], 2
    %v238 = vld [vmem:[%s237] ss:$8 sm:$0xf]
    %s239 = scalar_lea.vmem [#allocation0], 2
    %v240 = vld [vmem:[%s239] ss:$8 sm:$0xf0]
    %vm241 = vcmask 1047556
    %v242 = vsel %vm241, %v240, %v238
    %243 = vrot.lane.b32.xlu0 %v242, 32
    %v244 = vpop.permute.xlu0 %243
    %vm245 = vcmask 392448
    %246 = vst.msk [vmem:[%s1] sm:$0xff] %vm245, %v244
    %s247 = scalar_lea.vmem [#allocation0], 66
    %v248 = vld [vmem:[%s247] ss:$8 sm:$0xf]
    %s249 = scalar_lea.vmem [#allocation0], 66
    %v250 = vld [vmem:[%s249] ss:$8 sm:$0xf0]
    %vm251 = vcmask 1047556
    %v252 = vsel %vm251, %v250, %v248
    %253 = vrot.lane.b32.xlu0 %v252, 32
    %v254 = vpop.permute.xlu0 %253
    %vm255 = vcmask 392448
    %s256 = scalar_lea.vmem %s1, 8
    %257 = vst.msk [vmem:[%s256] sm:$0xff] %vm255, %v254
    %s258 = scalar_lea.vmem [#allocation0], 130
    %v259 = vld [vmem:[%s258] ss:$8 sm:$0xf]
    %s260 = scalar_lea.vmem [#allocation0], 130
    %v261 = vld [vmem:[%s260] ss:$8 sm:$0xf0]
    %vm262 = vcmask 1047556
    %v263 = vsel %vm262, %v261, %v259
    %264 = vrot.lane.b32.xlu0 %v263, 32
    %v265 = vpop.permute.xlu0 %264
    %vm266 = vcmask 392448
    %s267 = scalar_lea.vmem %s1, 16
    %268 = vst.msk [vmem:[%s267] sm:$0xff] %vm266, %v265
    %s269 = scalar_lea.vmem [#allocation0], 194
    %v270 = vld [vmem:[%s269] ss:$8 sm:$0xf]
    %s271 = scalar_lea.vmem [#allocation0], 194
    %v272 = vld [vmem:[%s271] ss:$8 sm:$0xf0]
    %vm273 = vcmask 1047556
    %v274 = vsel %vm273, %v272, %v270
    %275 = vrot.lane.b32.xlu0 %v274, 32
    %v276 = vpop.permute.xlu0 %275
    %vm277 = vcmask 392448
    %s278 = scalar_lea.vmem %s1, 24
    %279 = vst.msk [vmem:[%s278] sm:$0xff] %vm277, %v276
    %s280 = scalar_lea.vmem [#allocation0], 1
    %v281 = vld [vmem:[%s280] ss:$8 sm:$0xf]
    %s282 = scalar_lea.vmem [#allocation0], 1
    %v283 = vld [vmem:[%s282] ss:$8 sm:$0xf0]
    %vm284 = vcmask 1047556
    %v285 = vsel %vm284, %v283, %v281
    %286 = vrot.lane.b32.xlu0 %v285, 16
    %v287 = vpop.permute.xlu0 %286
    %vm288 = vcmask 261248
    %289 = vst.msk [vmem:[%s1] sm:$0xff] %vm288, %v287
    %s290 = scalar_lea.vmem [#allocation0], 65
    %v291 = vld [vmem:[%s290] ss:$8 sm:$0xf]
    %s292 = scalar_lea.vmem [#allocation0], 65
    %v293 = vld [vmem:[%s292] ss:$8 sm:$0xf0]
    %vm294 = vcmask 1047556
    %v295 = vsel %vm294, %v293, %v291
    %296 = vrot.lane.b32.xlu0 %v295, 16
    %v297 = vpop.permute.xlu0 %296
    %vm298 = vcmask 261248
    %s299 = scalar_lea.vmem %s1, 8
    %300 = vst.msk [vmem:[%s299] sm:$0xff] %vm298, %v297
    %s301 = scalar_lea.vmem [#allocation0], 129
    %v302 = vld [vmem:[%s301] ss:$8 sm:$0xf]
    %s303 = scalar_lea.vmem [#allocation0], 129
    %v304 = vld [vmem:[%s303] ss:$8 sm:$0xf0]
    %vm305 = vcmask 1047556
    %v306 = vsel %vm305, %v304, %v302
    %307 = vrot.lane.b32.xlu0 %v306, 16
    %v308 = vpop.permute.xlu0 %307
    %vm309 = vcmask 261248
    %s310 = scalar_lea.vmem %s1, 16
    %311 = vst.msk [vmem:[%s310] sm:$0xff] %vm309, %v308
    %s312 = scalar_lea.vmem [#allocation0], 193
    %v313 = vld [vmem:[%s312] ss:$8 sm:$0xf]
    %s314 = scalar_lea.vmem [#allocation0], 193
    %v315 = vld [vmem:[%s314] ss:$8 sm:$0xf0]
    %vm316 = vcmask 1047556
    %v317 = vsel %vm316, %v315, %v313
    %318 = vrot.lane.b32.xlu0 %v317, 16
    %v319 = vpop.permute.xlu0 %318
    %vm320 = vcmask 261248
    %s321 = scalar_lea.vmem %s1, 24
    %322 = vst.msk [vmem:[%s321] sm:$0xff] %vm320, %v319

// kernel: albert_base_forward.1
$region0: #{albert_base_forward.1}
  #allocation0 [shape = 'u32[]', space=smem, size = 0x4, offset = 0x4, fixed_abs, tag = 'smem constant byte address 0x4 - core index']
  #allocation1 [shape = 'u32[144,128]{1,0:T(1,128)}', space=vmem, size = 0x12000, scoped, tag = 'internal scratch']
  %s0 = inlined_call_operand.vmem [shape: f32[2,16,32], index: 0, kind: input, shape index: {}]
  %s1 = inlined_call_operand.vmem [shape: f32[2,16,64], index: 1, kind: input, shape index: {}]
  %s2 = inlined_call_operand.vmem [shape: bf16[480,192], index: 2, kind: input, shape index: {}]
  %s3 = inlined_call_operand.vmem [shape: f32[16,192], index: 3, kind: input, shape index: {}]
  %s4 = inlined_call_operand.vmem [shape: f32[64,144], index: 4, kind: input, shape index: {}]
  %s5 = inlined_call_operand.hbm [shape: f32[2,2,128], index: 5, kind: output, shape index: {}]
  %s6 = sld [smem:[#allocation0]]
  $region53: #{albert_base_forward.1} parent=0
    _
  %s8 = ssub.s32 1, %s6
  %s9 = scalar_select 0, %s8, %s6
  $region1: #{albert_base_forward.1} parent=0
    #allocation2 [shape = 'u8[2048]{0}', space=vmem, size = 0x800, scoped, tag = 'output window, operand 0']
    #allocation3 [shape = 's32[2]{0}', space=sflag, size = 0x8, scoped, tag = 'scoped memory for albert_base_forward.1']
    %10 = vsyncpa [#allocation3], 0
    %s11 = scalar_lea.sflag [#allocation3], 1
    %12 = vsyncpa %s11, 0
    loop: start=0, step=1, limit=4
    $region2: #{albert_base_forward.1} parent=1 // loop_pre_header
      _
    $region3: #{albert_base_forward.1} parent=1 // loop_header
      %s14 = sphi 0, %s18
      %p15 = scmp.ge.s32.totalorder %s14, 4
      %s24 = sphi 0, %s26
      %s27 = sphi 0, %s24
      %s28 = sphi 0, %s27
      %s44 = sphi 0, %s28
      %s50 = sphi 0, %s52
      %s53 = sphi 0, %s50
      %s54 = sphi 0, %s53
      %s70 = sphi 0, %s54
      %s74 = sphi 0, %s74
      %s76 = sphi 0, %s74
      %s77 = sphi 0, %s76
      %s91 = sphi 0, %s77
      %s95 = sphi 0, %s95
      %s97 = sphi 0, %s95
      %s98 = sphi 0, %s97
      %s112 = sphi 0, %s98
      %s116 = sphi 0, %s116
      %s118 = sphi 0, %s116
      %s119 = sphi 0, %s118
      %s133 = sphi 0, %s119
      %s139 = sphi 0, %s141
      %s142 = sphi 0, %s139
      %s143 = sphi 0, %s142
      %s159 = sphi 0, %s143
    $region4: #{albert_base_forward.1} parent=1 // loop_header_branch
      %17 = sbr.rel (%p15) target = $region8
    $region5: #{albert_base_forward.1} parent=1 // loop_body
      %s19 = ssub.s32 %s14, 1
      %s20 = ssub.s32 %s14, 2
      %s21 = sadd.s32 %s14, 1
      %s22 = ssub.s32 %s14, %s21
      %p23 = scmp.eq.s32.totalorder %s22, 0
      %s25 = sadd.s32 %s24, 1
      %s26 = scalar_select %p23, %s24, %s25
      %p29 = pneg %p23
      %p30 = scmp.eq.s32.totalorder %s14, 1
      %p31 = por %p29, %p30
      %p32 = scmp.ne.s32.totalorder %s24, %s27
      %p33 = scmp.eq.s32.totalorder %s14, 0
      %p34 = por %p32, %p33
      %p35 = scmp.ne.s32.totalorder %s24, %s27
      %p36 = scmp.eq.s32.totalorder %s19, 1
      %p37 = por %p35, %p36
      %p38 = scmp.ne.s32.totalorder %s27, %s28
      %p39 = scmp.eq.s32.totalorder %s19, 0
      %p40 = por %p38, %p39
      %p41 = scmp.ne.s32.totalorder %s27, %s28
      %p42 = scmp.eq.s32.totalorder %s20, 1
      %p43 = por %p41, %p42
      %p45 = scmp.ne.s32.totalorder %s28, %s44
      %p46 = scmp.eq.s32.totalorder %s20, 0
      %p47 = por %p45, %p46
      %s48 = ssub.s32 %s14, %s21
      %p49 = scmp.eq.s32.totalorder %s48, 0
      %s51 = sadd.s32 %s50, 1
      %s52 = scalar_select %p49, %s50, %s51
      %p55 = pneg %p49
      %p56 = scmp.eq.s32.totalorder %s14, 1
      %p57 = por %p55, %p56
      %p58 = scmp.ne.s32.totalorder %s50, %s53
      %p59 = scmp.eq.s32.totalorder %s14, 0
      %p60 = por %p58, %p59
      %p61 = scmp.ne.s32.totalorder %s50, %s53
      %p62 = scmp.eq.s32.totalorder %s19, 1
      %p63 = por %p61, %p62
      %p64 = scmp.ne.s32.totalorder %s53, %s54
      %p65 = scmp.eq.s32.totalorder %s19, 0
      %p66 = por %p64, %p65
      %p67 = scmp.ne.s32.totalorder %s53, %s54
      %p68 = scmp.eq.s32.totalorder %s20, 1
      %p69 = por %p67, %p68
      %p71 = scmp.ne.s32.totalorder %s54, %s70
      %p72 = scmp.eq.s32.totalorder %s20, 0
      %p73 = por %p71, %p72
      %s75 = sadd.s32 %s74, 1
      %p78 = scmp.eq.s32.totalorder %s14, 1
      %p79 = scmp.ne.s32.totalorder %s74, %s76
      %p80 = scmp.eq.s32.totalorder %s14, 0
      %p81 = por %p79, %p80
      %p82 = scmp.ne.s32.totalorder %s74, %s76
      %p83 = scmp.eq.s32.totalorder %s19, 1
      %p84 = por %p82, %p83
      %p85 = scmp.ne.s32.totalorder %s76, %s77
      %p86 = scmp.eq.s32.totalorder %s19, 0
      %p87 = por %p85, %p86
      %p88 = scmp.ne.s32.totalorder %s76, %s77
      %p89 = scmp.eq.s32.totalorder %s20, 1
      %p90 = por %p88, %p89
      %p92 = scmp.ne.s32.totalorder %s77, %s91
      %p93 = scmp.eq.s32.totalorder %s20, 0
      %p94 = por %p92, %p93
      %s96 = sadd.s32 %s95, 1
      %p99 = scmp.eq.s32.totalorder %s14, 1
      %p100 = scmp.ne.s32.totalorder %s95, %s97
      %p101 = scmp.eq.s32.totalorder %s14, 0
      %p102 = por %p100, %p101
      %p103 = scmp.ne.s32.totalorder %s95, %s97
      %p104 = scmp.eq.s32.totalorder %s19, 1
      %p105 = por %p103, %p104
      %p106 = scmp.ne.s32.totalorder %s97, %s98
      %p107 = scmp.eq.s32.totalorder %s19, 0
      %p108 = por %p106, %p107
      %p109 = scmp.ne.s32.totalorder %s97, %s98
      %p110 = scmp.eq.s32.totalorder %s20, 1
      %p111 = por %p109, %p110
      %p113 = scmp.ne.s32.totalorder %s98, %s112
      %p114 = scmp.eq.s32.totalorder %s20, 0
      %p115 = por %p113, %p114
      %s117 = sadd.s32 %s116, 1
      %p120 = scmp.eq.s32.totalorder %s14, 1
      %p121 = scmp.ne.s32.totalorder %s116, %s118
      %p122 = scmp.eq.s32.totalorder %s14, 0
      %p123 = por %p121, %p122
      %p124 = scmp.ne.s32.totalorder %s116, %s118
      %p125 = scmp.eq.s32.totalorder %s19, 1
      %p126 = por %p124, %p125
      %p127 = scmp.ne.s32.totalorder %s118, %s119
      %p128 = scmp.eq.s32.totalorder %s19, 0
      %p129 = por %p127, %p128
      %p130 = scmp.ne.s32.totalorder %s118, %s119
      %p131 = scmp.eq.s32.totalorder %s20, 1
      %p132 = por %p130, %p131
      %p134 = scmp.ne.s32.totalorder %s119, %s133
      %p135 = scmp.eq.s32.totalorder %s20, 0
      %p136 = por %p134, %p135
      %s137 = ssub.s32 %s14, %s21
      %p138 = scmp.eq.s32.totalorder %s137, 0
      %s140 = sadd.s32 %s139, 1
      %s141 = scalar_select %p138, %s139, %s140
      %p144 = pneg %p138
      %p145 = scmp.eq.s32.totalorder %s14, 1
      %p146 = por %p144, %p145
      %p147 = scmp.ne.s32.totalorder %s139, %s142
      %p148 = scmp.eq.s32.totalorder %s14, 0
      %p149 = por %p147, %p148
      %p150 = scmp.ne.s32.totalorder %s139, %s142
      %p151 = scmp.eq.s32.totalorder %s19, 1
      %p152 = por %p150, %p151
      %p153 = scmp.ne.s32.totalorder %s142, %s143
      %p154 = scmp.eq.s32.totalorder %s19, 0
      %p155 = por %p153, %p154
      %p156 = scmp.ne.s32.totalorder %s142, %s143
      %p157 = scmp.eq.s32.totalorder %s20, 1
      %p158 = por %p156, %p157
      %p160 = scmp.ne.s32.totalorder %s143, %s159
      %p161 = scmp.eq.s32.totalorder %s20, 0
      %p162 = por %p160, %p161
      %p163 = scmp.le.s32.totalorder 1, %s14
      %p164 = scmp.lt.s32.totalorder %s14, 3
      %p165 = pnand %p163, %p164
      %p166 = pneg %p165
      // Predicated region
      $region9: #{albert_base_forward.1} parent=5 // pred_check
        _
      $region10: #{albert_base_forward.1} parent=5 // pred_check_branch
        %168 = sbr.rel (%p165) target = $region12
      $region11: #{albert_base_forward.1} parent=5 // pred_region
        %s169 = ssub.s32 %s14, 1
        // Predicated region
        $region13: #{albert_base_forward.1} parent=11 // pred_check
          %p170 = pneg %p87
        $region14: #{albert_base_forward.1} parent=11 // pred_check_branch
          %172 = sbr.rel (%p170) target = $region16
        $region15: #{albert_base_forward.1} parent=11 // pred_region
          _
        $region16: #{albert_base_forward.1} parent=11 // pred_fallthru
          _
        // Predicated region
        $region17: #{albert_base_forward.1} parent=11 // pred_check
          %p173 = pneg %p108
        $region18: #{albert_base_forward.1} parent=11 // pred_check_branch
          %175 = sbr.rel (%p173) target = $region20
        $region19: #{albert_base_forward.1} parent=11 // pred_region
          _
        $region20: #{albert_base_forward.1} parent=11 // pred_fallthru
          _
        // Predicated region
        $region21: #{albert_base_forward.1} parent=11 // pred_check
          %p176 = pneg %p129
        $region22: #{albert_base_forward.1} parent=11 // pred_check_branch
          %178 = sbr.rel (%p176) target = $region24
        $region23: #{albert_base_forward.1} parent=11 // pred_region
          _
        $region24: #{albert_base_forward.1} parent=11 // pred_fallthru
          _
      $region12: #{albert_base_forward.1} parent=5 // pred_fallthru
        _
      %p179 = scmp.lt.s32.totalorder %s14, 2
      // Predicated region
      $region25: #{albert_base_forward.1} parent=5 // pred_check
        %p180 = pneg %p179
      $region26: #{albert_base_forward.1} parent=5 // pred_check_branch
        %182 = sbr.rel (%p180) target = $region28
      $region27: #{albert_base_forward.1} parent=5 // pred_region
        // Predicated region
        $region29: #{albert_base_forward.1} parent=27 // pred_check
          %p183 = pneg %p34
        $region30: #{albert_base_forward.1} parent=27 // pred_check_branch
          %185 = sbr.rel (%p183) target = $region32
        $region31: #{albert_base_forward.1} parent=27 // pred_region
          %p186 = scmp.lt.s32.totalorder %s14, 1
          %s187 = scalar_select %p186, %s14, 1
          %s188 = smul.addr %s187, 2
          %s189 = smul.addr %s188, 8
          %s190 = scalar_lea.vmem %s0, %s189
        $region32: #{albert_base_forward.1} parent=27 // pred_fallthru
          _
        // Predicated region
        $region33: #{albert_base_forward.1} parent=27 // pred_check
          %p191 = pneg %p60
        $region34: #{albert_base_forward.1} parent=27 // pred_check_branch
          %193 = sbr.rel (%p191) target = $region36
        $region35: #{albert_base_forward.1} parent=27 // pred_region
          %p194 = scmp.lt.s32.totalorder %s14, 1
          %s195 = scalar_select %p194, %s14, 1
          %s196 = smul.addr %s195, 2
          %s197 = smul.addr %s196, 8
          %s198 = scalar_lea.vmem %s1, %s197
        $region36: #{albert_base_forward.1} parent=27 // pred_fallthru
          _
      $region28: #{albert_base_forward.1} parent=5 // pred_fallthru
        _
      %p199 = scmp.le.s32.totalorder 1, %s14
      %p200 = scmp.lt.s32.totalorder %s14, 3
      %p201 = pnand %p199, %p200
      %p202 = pneg %p201
      // Predicated region
      $region37: #{albert_base_forward.1} parent=5 // pred_check
        _
      $region38: #{albert_base_forward.1} parent=5 // pred_check_branch
        %204 = sbr.rel (%p201) target = $region40
      $region39: #{albert_base_forward.1} parent=5 // pred_region
        %s205 = ssub.s32 %s14, 1
        %p206 = scmp.lt.s32.totalorder %s19, 1
        %s207 = scalar_select %p206, %s19, 1
        %s208 = smul.addr %s207, 2
        %s209 = smul.addr %s208, 8
        %s210 = scalar_lea.vmem %s0, %s209
        %p211 = pneg %p40
        %p212 = pneg %p37
        %p213 = scmp.lt.s32.totalorder %s19, 1
        %s214 = scalar_select %p213, %s19, 1
        %s215 = smul.addr %s214, 2
        %s216 = smul.addr %s215, 8
        %s217 = scalar_lea.vmem %s1, %s216
        %p218 = pneg %p66
        %p219 = pneg %p63
        %p220 = pneg %p87
        %p221 = pneg %p84
        %p222 = pneg %p108
        %p223 = pneg %p105
        %p224 = pneg %p129
        %p225 = pneg %p126
        %p226 = pneg %p155
        %p227 = pneg %p152
        %s228 = sand.u32 %s142, 1
        %s229 = scalar_lea.sflag [#allocation3], %s228
        %s230 = sand.u32 %s142, 1
        %s231 = smul.addr %s230, 2
        %s232 = scalar_lea.vmem [#allocation2], %s231
        %p233 = scmp.lt.s32.totalorder %s19, 1
        %s234 = scalar_select %p233, %s19, 1
        %s235 = smul.addr %s234, 2
        %s236 = smul.addr %s235, 8
        %s237 = scalar_lea.vmem %s0, %s236
        %p238 = scmp.lt.s32.totalorder %s19, 1
        %s239 = scalar_select %p238, %s19, 1
        %s240 = smul.addr %s239, 2
        %s241 = smul.addr %s240, 8
        %s242 = scalar_lea.vmem %s1, %s241
        %v244 = vld [vmem:[%s2] sm:$0xf]
        %v245 = vld [vmem:[%s2 + $0x8] sm:$0xf]
        %v246 = vld [vmem:[%s2 + $0x10] sm:$0xf]
        %v247 = vld [vmem:[%s2 + $0x18] sm:$0xf]
        %v248 = vld [vmem:[%s2 + $0x20] sm:$0xff]
        %v249 = vld [vmem:[%s2 + $0x28] sm:$0xff]
        %v250 = vld [vmem:[%s2 + $0x30] sm:$0xff]
        %v251 = vld [vmem:[%s2 + $0x38] sm:$0xff]
        %v252 = vld [vmem:[%s2 + $0x40] sm:$0xff]
        %v253 = vld [vmem:[%s2 + $0x48] sm:$0xff]
        %v254 = vld [vmem:[%s2 + $0x50] sm:$0xff]
        %v255 = vld [vmem:[%s2 + $0x58] sm:$0xff]
        %v256 = vld [vmem:[%s2 + $0x60] sm:$0xf]
        %v257 = vld [vmem:[%s2 + $0x68] sm:$0xf]
        %v258 = vld [vmem:[%s2 + $0x70] sm:$0xf]
        %v259 = vld [vmem:[%s2 + $0x78] sm:$0xf]
        %v260 = vld [vmem:[%s2 + $0x80] sm:$0xf]
        %v261 = vld [vmem:[%s2 + $0x88] sm:$0xf]
        %v262 = vld [vmem:[%s2 + $0x90] sm:$0xf]
        %v263 = vld [vmem:[%s2 + $0x98] sm:$0xf]
        %v264 = vld [vmem:[%s2 + $0xa0] sm:$0xf]
        %v265 = vld [vmem:[%s2 + $0xa8] sm:$0xf]
        %v266 = vld [vmem:[%s2 + $0xb0] sm:$0xf]
        %v267 = vld [vmem:[%s2 + $0xb8] sm:$0xf]
        %v268 = vld [vmem:[%s2 + $0xc0] sm:$0xf]
        %v269 = vld [vmem:[%s2 + $0xc8] sm:$0xf]
        %v270 = vld [vmem:[%s2 + $0xd0] sm:$0xf]
        %v271 = vld [vmem:[%s2 + $0xd8] sm:$0xf]
        %v272 = vld [vmem:[%s2 + $0xe0] sm:$0xf]
        %v273 = vld [vmem:[%s2 + $0xe8] sm:$0xf]
        %v274 = vld [vmem:[%s2 + $0xf0] sm:$0xf]
        %v275 = vld [vmem:[%s2 + $0xf8] sm:$0xf]
        %v276 = vld [vmem:[%s2 + $0x100] sm:$0xf]
        %v277 = vld [vmem:[%s2 + $0x108] sm:$0xf]
        %v278 = vld [vmem:[%s2 + $0x110] sm:$0xf]
        %v279 = vld [vmem:[%s2 + $0x118] sm:$0xf]
        %v280 = vld [vmem:[%s2 + $0x120] sm:$0xf]
        %v281 = vld [vmem:[%s2 + $0x128] sm:$0xf]
        %v282 = vld [vmem:[%s2 + $0x130] sm:$0xf]
        %v283 = vld [vmem:[%s2 + $0x138] sm:$0xf]
        %v284 = vld [vmem:[%s2 + $0x140] sm:$0xf]
        %v285 = vld [vmem:[%s2 + $0x148] sm:$0xf]
        %v286 = vld [vmem:[%s2 + $0x150] sm:$0xf]
        %v287 = vld [vmem:[%s2 + $0x158] sm:$0xf]
        %v288 = vld [vmem:[%s2 + $0x160] sm:$0xf]
        %v289 = vld [vmem:[%s2 + $0x168] sm:$0xf]
        %v290 = vld [vmem:[%s2 + $0x170] sm:$0xf]
        %v291 = vld [vmem:[%s2 + $0x178] sm:$0xf]
        %v292 = vld [vmem:[%s2 + $0x180] sm:$0xf]
        %v293 = vld [vmem:[%s2 + $0x188] sm:$0xf]
        %v294 = vld [vmem:[%s2 + $0x190] sm:$0xf]
        %v295 = vld [vmem:[%s2 + $0x198] sm:$0xf]
        %v296 = vld [vmem:[%s2 + $0x1a0] sm:$0xf]
        %v297 = vld [vmem:[%s2 + $0x1a8] sm:$0xf]
        %v298 = vld [vmem:[%s2 + $0x1b0] sm:$0xf]
        %v299 = vld [vmem:[%s2 + $0x1b8] sm:$0xf]
        %v300 = vld [vmem:[%s2 + $0x1c0] sm:$0xf]
        %v301 = vld [vmem:[%s2 + $0x1c8] sm:$0xf]
        %v302 = vld [vmem:[%s2 + $0x1d0] sm:$0xf]
        %v303 = vld [vmem:[%s2 + $0x1d8] sm:$0xf]
        %v304 = vld [vmem:[%s3] ss:$0 sm:$0xff]
        %v305 = vld [vmem:[%s3 + $0x1] ss:$0 sm:$0xff]
        %v306 = vld [vmem:[%s3 + $0x2] ss:$0 sm:$0xff]
        %s307 = scalar_lea.vmem %s3, 3
        %v308 = vld [vmem:[%s307] ss:$8 sm:$0x3]
        %v309 = vld [vmem:[%s3 + $0x4] ss:$0 sm:$0xff]
        %v310 = vld [vmem:[%s3 + $0x5] ss:$0 sm:$0xff]
        %v311 = vld [vmem:[%s3 + $0x6] ss:$0 sm:$0xff]
        %v312 = vld [vmem:[%s3 + $0x7] ss:$0 sm:$0xff]
        %v313 = vld [vmem:[%s3 + $0x10] ss:$0 sm:$0xff]
        %v314 = vld [vmem:[%s3 + $0x11] ss:$0 sm:$0xff]
        %v315 = vld [vmem:[%s3 + $0x12] ss:$0 sm:$0xff]
        %v316 = vld [vmem:[%s3 + $0x13] ss:$0 sm:$0xff]
        %v317 = vld [vmem:[%s3 + $0x14] ss:$0 sm:$0xff]
        %v318 = vld [vmem:[%s4] sm:$0xff]
        %v319 = vld [vmem:[%s4 + $0x10] sm:$0xff]
        %v320 = vld [vmem:[%s4 + $0x20] sm:$0xff]
        %v321 = vld [vmem:[%s4 + $0x30] sm:$0xff]
        %v322 = vld [vmem:[%s4 + $0x40] sm:$0xff]
        %v323 = vld [vmem:[%s4 + $0x50] sm:$0xff]
        %v324 = vld [vmem:[%s4 + $0x60] sm:$0xff]
        %v325 = vld [vmem:[%s4 + $0x70] sm:$0xff]
        %v326 = vld [vmem:[%s4 + $0x8] sm:$0x3]
        %v327 = vld [vmem:[%s242] sm:$0xff]
        %v328 = vld [vmem:[%s242 + $0x8] sm:$0xff]
        %v329 = vld [vmem:[%s237] sm:$0xff]
        %v330 = vld [vmem:[%s237 + $0x8] sm:$0xff]
        %vm331 = vcmask 261120
        %v332 = vsel %vm331, %v329, 0.0
        %333 = vadd.xlane.f32.xlu0 %v332
        %v334 = vpop.xlane.xlu0 %333
        %v335 = vsel %vm331, %v330, 0.0
        %336 = vadd.xlane.f32.xlu0 %v335
        %v337 = vpop.xlane.xlu0 %336
        %v338 = vrcp.pop 32.0
        %v339 = vmul.f32 %v334, %v338
        %v340 = vmul.f32 %v337, %v338
        %v341 = vsub.f32 %v329, %v339
        %v342 = vsub.f32 %v330, %v340
        %v343 = vmul.f32 %v341, %v341
        %v344 = vmul.f32 %v342, %v342
        %v345 = vsel %vm331, %v343, 0.0
        %346 = vadd.xlane.f32.xlu0 %v345
        %v347 = vpop.xlane.xlu0 %346
        %v348 = vsel %vm331, %v344, 0.0
        %349 = vadd.xlane.f32.xlu0 %v348
        %v350 = vpop.xlane.xlu0 %349
        %v351 = vmul.f32 %v347, %v338
        %v352 = vmul.f32 %v350, %v338
        %v353 = vadd.f32 %v351, 1e-12
        %v354 = vadd.f32 %v352, 1e-12
        %v355 = vrsqrt.pop %v353
        %v356 = vrsqrt.pop %v354
        %v357 = vmul.f32 %v341, %v355
        %v358 = vmul.f32 %v342, %v356
        %v359 = vmul.f32 %v357, %v304
        %v360 = vmul.f32 %v358, %v304
        %v361 = vadd.f32 %v359, %v305
        %v362 = vadd.f32 %v360, %v305
        %v363 = vpack.c.bf16 %v362, %v361
        %v368 = vunpack.c.l.b16 %v244
        %v369 = vunpack.c.l.b16 %v245
        %v370 = vunpack.c.l.b16 %v246
        %v371 = vunpack.c.l.b16 %v247
        %v372 = vpack.c.b16 %v369, %v368
        %v373 = vpack.c.b16 %v371, %v370
        %v377 = vsel %vm331, %v363, 0
        %379 = vmatprep.subr.bf16.mxu0 0
        %380 = vmatpush1.bf16.msra.mxu0 0
        %381 = vmatprep.subr.bf16.mxu0 0
        %382 = vmatpush1.bf16.msra.mxu0 0
        %383 = vmatprep.subr.bf16.mxu0 0
        %384 = vmatpush1.bf16.msra.mxu0 0
        %385 = vmatprep.subr.bf16.mxu0 0
        %386 = vmatpush1.bf16.msra.mxu0 0
        %387 = vmatprep.subr.bf16.mxu0 0
        %388 = vmatpush1.bf16.msra.mxu0 0
        %389 = vmatprep.subr.bf16.mxu0 0
        %390 = vmatpush1.bf16.msra.mxu0 0
        %391 = vmatprep.subr.bf16.mxu0 0
        %392 = vmatpush1.bf16.msra.mxu0 %v373
        %393 = vmatprep.subr.bf16.mxu0 0
        %394 = vmatpush1.bf16.msra.mxu0 %v372
        %395 = vmatprep.subr.bf16.mxu0 0
        %396 = vmatpush2.bf16.msra.mxu0 0
        %397 = vmatprep.subr.bf16.mxu0 0
        %398 = vmatpush2.bf16.msra.mxu0 0
        %399 = vmatprep.subr.bf16.mxu0 0
        %400 = vmatpush2.bf16.msra.mxu0 0
        %401 = vmatprep.subr.bf16.mxu0 0
        %402 = vmatpush2.bf16.msra.mxu0 0
        %403 = vmatprep.subr.bf16.mxu0 0
        %404 = vmatpush2.bf16.msra.mxu0 0
        %405 = vmatprep.subr.bf16.mxu0 0
        %406 = vmatpush2.bf16.msra.mxu0 0
        %407 = vmatprep.subr.bf16.mxu0 0
        %408 = vmatpush2.bf16.msra.mxu0 0
        %409 = vmatprep.subr.bf16.mxu0 0
        %410 = vmatpush2.bf16.msra.mxu0 0
        %411 = vmatprep.mubr.bf16.mxu0 0
        %412 = vmatmul.mubr.bf16.gmra.mxu0 %v377
        %v413 = vpop.f32.mrf.mxu0
        %v414 = vadd.f32 %v306, %v413
        %v415 = vpop.f32.mrf.mxu0
        %v416 = vpop.f32.mrf.mxu0
        %v417 = vadd.f32 %v306, %v416
        %v418 = vpop.f32.mrf.mxu0
        %419 = vdwg.mxu0
        %v420 = vpack.c.bf16 %v417, %v414
        %v422 = vlaneseq
        %v423 = vshrl.u32 %v422, 7
        %v424 = vsub.s32 0, %v423
        %v425 = vrot.slane %v308, %v424
        %v426 = vlaneseq
        %v427 = vshrl.u32 %v426, 7
        %v428 = vsub.s32 1, %v427
        %v429 = vrot.slane %v308, %v428
        %v440 = vunpack.c.l.b16 %v248
        %v441 = vunpack.c.h.b16 %v248
        %v442 = vunpack.c.l.b16 %v249
        %v443 = vunpack.c.h.b16 %v249
        %v444 = vunpack.c.l.b16 %v250
        %v445 = vunpack.c.h.b16 %v250
        %v446 = vunpack.c.l.b16 %v251
        %v447 = vunpack.c.h.b16 %v251
        %v448 = vunpack.c.l.b16 %v252
        %v449 = vunpack.c.h.b16 %v252
        %v450 = vunpack.c.l.b16 %v253
        %v451 = vunpack.c.h.b16 %v253
        %v452 = vunpack.c.l.b16 %v254
        %v453 = vunpack.c.h.b16 %v254
        %v454 = vunpack.c.l.b16 %v255
        %v455 = vunpack.c.h.b16 %v255
        %v456 = vpack.c.b16 %v442, %v440
        %v457 = vpack.c.b16 %v443, %v441
        %v458 = vpack.c.b16 %v446, %v444
        %v459 = vpack.c.b16 %v447, %v445
        %v460 = vpack.c.b16 %v450, %v448
        %v461 = vpack.c.b16 %v451, %v449
        %v462 = vpack.c.b16 %v454, %v452
        %v463 = vpack.c.b16 %v455, %v453
        %vm472 = vcmask 523264
        %v474 = vsel %vm472, %v420, 0
        %476 = vmatprep.subr.bf16.mxu0 0
        %477 = vmatpush1.bf16.msra.mxu0 0
        %478 = vmatprep.subr.bf16.mxu0 0
        %479 = vmatpush1.bf16.msra.mxu0 0
        %480 = vmatprep.subr.bf16.mxu0 0
        %481 = vmatpush1.bf16.msra.mxu0 0
        %482 = vmatprep.subr.bf16.mxu0 0
        %483 = vmatpush1.bf16.msra.mxu0 0
        %484 = vmatprep.subr.bf16.mxu0 %v463
        %485 = vmatpush1.bf16.msra.mxu0 %v462
        %486 = vmatprep.subr.bf16.mxu0 %v461
        %487 = vmatpush1.bf16.msra.mxu0 %v460
        %488 = vmatprep.subr.bf16.mxu0 %v459
        %489 = vmatpush1.bf16.msra.mxu0 %v458
        %490 = vmatprep.subr.bf16.mxu0 %v457
        %491 = vmatpush1.bf16.msra.mxu0 %v456
        %492 = vmatprep.subr.bf16.mxu0 0
        %493 = vmatpush2.bf16.msra.mxu0 0
        %494 = vmatprep.subr.bf16.mxu0 0
        %495 = vmatpush2.bf16.msra.mxu0 0
        %496 = vmatprep.subr.bf16.mxu0 0
        %497 = vmatpush2.bf16.msra.mxu0 0
        %498 = vmatprep.subr.bf16.mxu0 0
        %499 = vmatpush2.bf16.msra.mxu0 0
        %500 = vmatprep.subr.bf16.mxu0 0
        %501 = vmatpush2.bf16.msra.mxu0 0
        %502 = vmatprep.subr.bf16.mxu0 0
        %503 = vmatpush2.bf16.msra.mxu0 0
        %504 = vmatprep.subr.bf16.mxu0 0
        %505 = vmatpush2.bf16.msra.mxu0 0
        %506 = vmatprep.subr.bf16.mxu0 0
        %507 = vmatpush2.bf16.msra.mxu0 0
        %508 = vmatprep.mubr.bf16.mxu0 0
        %509 = vmatmul.mubr.bf16.gmra.mxu0 %v474
        %v510 = vpop.f32.mrf.mxu0
        %v511 = vadd.f32 %v425, %v510
        %v512 = vpop.f32.mrf.mxu0
        %v513 = vadd.f32 %v429, %v512
        %v514 = vpop.f32.mrf.mxu0
        %v515 = vadd.f32 %v425, %v514
        %v516 = vpop.f32.mrf.mxu0
        %v517 = vadd.f32 %v429, %v516
        %518 = vdwg.mxu0
        %527 = vrot.lane.b32.xlu0 %v318, 64
        %v528 = vpop.permute.xlu0 %527
        %529 = vrot.lane.b32.xlu0 %v319, 64
        %v530 = vpop.permute.xlu0 %529
        %531 = vrot.lane.b32.xlu0 %v320, 64
        %v532 = vpop.permute.xlu0 %531
        %533 = vrot.lane.b32.xlu0 %v321, 64
        %v534 = vpop.permute.xlu0 %533
        %535 = vrot.lane.b32.xlu0 %v322, 64
        %v536 = vpop.permute.xlu0 %535
        %537 = vrot.lane.b32.xlu0 %v323, 64
        %v538 = vpop.permute.xlu0 %537
        %539 = vrot.lane.b32.xlu0 %v324, 64
        %v540 = vpop.permute.xlu0 %539
        %541 = vrot.lane.b32.xlu0 %v325, 64
        %v542 = vpop.permute.xlu0 %541
        %v551 = vmul.f32 %v511, %v528
        %v552 = vmul.f32 %v515, %v530
        %v553 = vmul.f32 %v511, %v532
        %v554 = vmul.f32 %v515, %v534
        %v555 = vmul.f32 %v511, %v536
        %v556 = vmul.f32 %v515, %v538
        %v557 = vmul.f32 %v511, %v540
        %v558 = vmul.f32 %v515, %v542
        %v559 = vmul.f32 %v513, %v318
        %v560 = vmul.f32 %v517, %v319
        %v561 = vmul.f32 %v513, %v320
        %v562 = vmul.f32 %v517, %v321
        %v563 = vmul.f32 %v513, %v322
        %v564 = vmul.f32 %v517, %v323
        %v565 = vmul.f32 %v513, %v324
        %v566 = vmul.f32 %v517, %v325
        %v567 = vpack.c.bf16 %v515, %v511
        %v568 = vpack.c.bf16 %v552, %v551
        %v569 = vpack.c.bf16 %v554, %v553
        %v570 = vpack.c.bf16 %v556, %v555
        %v571 = vpack.c.bf16 %v558, %v557
        %576 = vrot.lane.b32.xlu0 %v568, 64
        %v577 = vpop.permute.xlu0 %576
        %578 = vrot.lane.b32.xlu0 %v569, 64
        %v579 = vpop.permute.xlu0 %578
        %580 = vrot.lane.b32.xlu0 %v570, 64
        %v581 = vpop.permute.xlu0 %580
        %582 = vrot.lane.b32.xlu0 %v571, 64
        %v583 = vpop.permute.xlu0 %582
        %v585 = vsel %vm472, %v567, 0
        %v588 = vsel %vm472, %v577, 0
        %v591 = vsel %vm472, %v579, 0
        %v594 = vsel %vm472, %v581, 0
        %v597 = vsel %vm472, %v583, 0
        %599 = vmatprep.subr.bf16.mxu0 0
        %600 = vmatpush1.bf16.xpose.msra.mxu0 0
        %601 = vmatprep.subr.bf16.mxu0 0
        %602 = vmatpush1.bf16.xpose.msra.mxu0 0
        %603 = vmatprep.subr.bf16.mxu0 0
        %604 = vmatpush1.bf16.xpose.msra.mxu0 0
        %605 = vmatprep.subr.bf16.mxu0 0
        %606 = vmatpush1.bf16.xpose.msra.mxu0 0
        %607 = vmatprep.subr.bf16.mxu0 0
        %608 = vmatpush1.bf16.xpose.msra.mxu0 %v597
        %609 = vmatprep.subr.bf16.mxu0 0
        %610 = vmatpush1.bf16.xpose.msra.mxu0 %v594
        %611 = vmatprep.subr.bf16.mxu0 0
        %612 = vmatpush1.bf16.xpose.msra.mxu0 %v591
        %613 = vmatprep.subr.bf16.mxu0 0
        %614 = vmatpush1.bf16.xpose.msra.mxu0 %v588
        %615 = vmatprep.subr.bf16.mxu0 0
        %616 = vmatpush2.bf16.xpose.msra.mxu0 0
        %617 = vmatprep.subr.bf16.mxu0 0
        %618 = vmatpush2.bf16.xpose.msra.mxu0 0
        %619 = vmatprep.subr.bf16.mxu0 0
        %620 = vmatpush2.bf16.xpose.msra.mxu0 0
        %621 = vmatprep.subr.bf16.mxu0 0
        %622 = vmatpush2.bf16.xpose.msra.mxu0 0
        %623 = vmatprep.subr.bf16.mxu0 0
        %624 = vmatpush2.bf16.xpose.msra.mxu0 0
        %625 = vmatprep.subr.bf16.mxu0 0
        %626 = vmatpush2.bf16.xpose.msra.mxu0 0
        %627 = vmatprep.subr.bf16.mxu0 0
        %628 = vmatpush2.bf16.xpose.msra.mxu0 0
        %629 = vmatprep.subr.bf16.mxu0 0
        %630 = vmatpush2.bf16.xpose.msra.mxu0 0
        %631 = vmatprep.mubr.bf16.mxu0 0
        %632 = vmatmul.mubr.bf16.gmra.mxu0 %v585
        %v633 = vpop.f32.mrf.mxu0
        %v634 = vadd.f32 %v327, %v633
        %v635 = vpop.f32.mrf.mxu0
        %v636 = vpop.f32.mrf.mxu0
        %v637 = vadd.f32 %v328, %v636
        %v638 = vpop.f32.mrf.mxu0
        %639 = vdwg.mxu0
        %v640 = vsel %vm472, %v634, -inf
        %641 = vmax.xlane.f32.xlu0 %v640
        %v642 = vpop.xlane.xlu0 %641
        %v643 = vsel %vm472, %v637, -inf
        %644 = vmax.xlane.f32.xlu0 %v643
        %v645 = vpop.xlane.xlu0 %644
        %v646 = vsub.f32 %v634, %v642
        %v647 = vsub.f32 %v637, %v645
        %v648 = vmul.f32 %v646, 1.442695
        %v649 = vpow.pop %v648
        %v650 = vmul.f32 %v647, 1.442695
        %v651 = vpow.pop %v650
        %v653 = vsel %vm472, %v649, 0
        %v656 = vsel %vm472, %v651, 0
        %658 = vmatprep.subr.mxu0 0.0
        %659 = vmatpush1.msra.mxu0 0.0
        %660 = vmatprep.subr.mxu0 0.0
        %661 = vmatpush1.msra.mxu0 0.0
        %662 = vmatprep.subr.mxu0 0.0
        %663 = vmatpush1.msra.mxu0 0.0
        %664 = vmatprep.subr.mxu0 0.0
        %665 = vmatpush1.msra.mxu0 0.0
        %666 = vmatprep.subr.mxu0 0.0
        %667 = vmatpush1.msra.mxu0 0.0
        %668 = vmatprep.subr.mxu0 0.0
        %669 = vmatpush1.msra.mxu0 0.0
        %670 = vmatprep.subr.mxu0 0.0
        %671 = vmatpush1.msra.mxu0 0.0
        %672 = vmatprep.subr.mxu0 0.0
        %673 = vmatpush1.msra.mxu0 0.0
        %674 = vmatprep.subr.mxu0 0.0
        %675 = vmatpush1.msra.mxu0 %v542
        %676 = vmatprep.subr.mxu0 0.0
        %677 = vmatpush1.msra.mxu0 %v540
        %678 = vmatprep.subr.mxu0 0.0
        %679 = vmatpush1.msra.mxu0 %v538
        %680 = vmatprep.subr.mxu0 0.0
        %681 = vmatpush1.msra.mxu0 %v536
        %682 = vmatprep.subr.mxu0 0.0
        %683 = vmatpush1.msra.mxu0 %v534
        %684 = vmatprep.subr.mxu0 0.0
        %685 = vmatpush1.msra.mxu0 %v532
        %686 = vmatprep.subr.mxu0 0.0
        %687 = vmatpush1.msra.mxu0 %v530
        %688 = vmatprep.subr.mxu0 0.0
        %689 = vmatpush1.msra.mxu0 %v528
        %690 = vmatprep.subr.mxu0 0.0
        %691 = vmatpush2.msra.mxu0 0.0
        %692 = vmatprep.subr.mxu0 0.0
        %693 = vmatpush2.msra.mxu0 0.0
        %694 = vmatprep.subr.mxu0 0.0
        %695 = vmatpush2.msra.mxu0 0.0
        %696 = vmatprep.subr.mxu0 0.0
        %697 = vmatpush2.msra.mxu0 0.0
        %698 = vmatprep.subr.mxu0 0.0
        %699 = vmatpush2.msra.mxu0 0.0
        %700 = vmatprep.subr.mxu0 0.0
        %701 = vmatpush2.msra.mxu0 0.0
        %702 = vmatprep.subr.mxu0 0.0
        %703 = vmatpush2.msra.mxu0 0.0
        %704 = vmatprep.subr.mxu0 0.0
        %705 = vmatpush2.msra.mxu0 0.0
        %706 = vmatprep.subr.mxu0 0.0
        %707 = vmatpush2.msra.mxu0 0.0
        %708 = vmatprep.subr.mxu0 0.0
        %709 = vmatpush2.msra.mxu0 0.0
        %710 = vmatprep.subr.mxu0 0.0
        %711 = vmatpush2.msra.mxu0 0.0
        %712 = vmatprep.subr.mxu0 0.0
        %713 = vmatpush2.msra.mxu0 0.0
        %714 = vmatprep.subr.mxu0 0.0
        %715 = vmatpush2.msra.mxu0 0.0
        %716 = vmatprep.subr.mxu0 0.0
        %717 = vmatpush2.msra.mxu0 0.0
        %718 = vmatprep.subr.mxu0 0.0
        %719 = vmatpush2.msra.mxu0 0.0
        %720 = vmatprep.subr.mxu0 0.0
        %721 = vmatpush2.msra.mxu0 0.0
        %722 = vmatprep.mubr.f32.mxu0 0.0
        %723 = vmatmul.mubr.f32.gmra.mxu0 %v653
        %v724 = vpop.f32.mrf.mxu0
        %v725 = vadd.f32 0.0, %v724
        %v726 = vpop.f32.mrf.mxu0
        %727 = vmatprep.mubr.f32.mxu0 0.0
        %728 = vmatmul.mubr.f32.gmra.mxu0 %v656
        %v729 = vpop.f32.mrf.mxu0
        %v730 = vadd.f32 0.0, %v729
        %v731 = vpop.f32.mrf.mxu0
        %732 = vdwg.mxu0
        %v733 = vrcp.pop %v725
        %v734 = vmul.f32 %v649, %v733
        %v735 = vrcp.pop %v730
        %v736 = vmul.f32 %v651, %v735
        %v737 = vpack.c.bf16 %v736, %v734
        %v738 = vpack.c.bf16 %v560, %v559
        %v739 = vpack.c.bf16 %v562, %v561
        %v740 = vpack.c.bf16 %v564, %v563
        %v741 = vpack.c.bf16 %v566, %v565
        %v743 = vsel %vm472, %v737, 0
        %745 = vmatprep.subr.bf16.mxu0 0
        %746 = vmatpush1.bf16.msra.mxu0 0
        %747 = vmatprep.subr.bf16.mxu0 0
        %748 = vmatpush1.bf16.msra.mxu0 0
        %749 = vmatprep.subr.bf16.mxu0 0
        %750 = vmatpush1.bf16.msra.mxu0 0
        %751 = vmatprep.subr.bf16.mxu0 0
        %752 = vmatpush1.bf16.msra.mxu0 0
        %753 = vmatprep.subr.bf16.mxu0 0
        %754 = vmatpush1.bf16.msra.mxu0 %v741
        %755 = vmatprep.subr.bf16.mxu0 0
        %756 = vmatpush1.bf16.msra.mxu0 %v740
        %757 = vmatprep.subr.bf16.mxu0 0
        %758 = vmatpush1.bf16.msra.mxu0 %v739
        %759 = vmatprep.subr.bf16.mxu0 0
        %760 = vmatpush1.bf16.msra.mxu0 %v738
        %761 = vmatprep.subr.bf16.mxu0 0
        %762 = vmatpush2.bf16.msra.mxu0 0
        %763 = vmatprep.subr.bf16.mxu0 0
        %764 = vmatpush2.bf16.msra.mxu0 0
        %765 = vmatprep.subr.bf16.mxu0 0
        %766 = vmatpush2.bf16.msra.mxu0 0
        %767 = vmatprep.subr.bf16.mxu0 0
        %768 = vmatpush2.bf16.msra.mxu0 0
        %769 = vmatprep.subr.bf16.mxu0 0
        %770 = vmatpush2.bf16.msra.mxu0 0
        %771 = vmatprep.subr.bf16.mxu0 0
        %772 = vmatpush2.bf16.msra.mxu0 0
        %773 = vmatprep.subr.bf16.mxu0 0
        %774 = vmatpush2.bf16.msra.mxu0 0
        %775 = vmatprep.subr.bf16.mxu0 0
        %776 = vmatpush2.bf16.msra.mxu0 0
        %777 = vmatprep.mubr.bf16.mxu0 0
        %778 = vmatmul.mubr.bf16.gmra.mxu0 %v743
        %v779 = vpop.f32.mrf.mxu0
        %v780 = vadd.f32 0.0, %v779
        %v781 = vpop.f32.mrf.mxu0
        %v782 = vpop.f32.mrf.mxu0
        %v783 = vadd.f32 0.0, %v782
        %v784 = vpop.f32.mrf.mxu0
        %785 = vdwg.mxu0
        %v786 = vpack.c.bf16 %v783, %v780
        %v795 = vunpack.c.l.b16 %v256
        %v796 = vunpack.c.l.b16 %v257
        %v797 = vunpack.c.l.b16 %v258
        %v798 = vunpack.c.l.b16 %v259
        %v799 = vunpack.c.l.b16 %v260
        %v800 = vunpack.c.l.b16 %v261
        %v801 = vunpack.c.l.b16 %v262
        %v802 = vunpack.c.l.b16 %v263
        %v803 = vpack.c.b16 %v796, %v795
        %v804 = vpack.c.b16 %v798, %v797
        %v805 = vpack.c.b16 %v800, %v799
        %v806 = vpack.c.b16 %v802, %v801
        %v812 = vsel %vm472, %v786, 0
        %814 = vmatprep.subr.bf16.mxu0 0
        %815 = vmatpush1.bf16.msra.mxu0 0
        %816 = vmatprep.subr.bf16.mxu0 0
        %817 = vmatpush1.bf16.msra.mxu0 0
        %818 = vmatprep.subr.bf16.mxu0 0
        %819 = vmatpush1.bf16.msra.mxu0 0
        %820 = vmatprep.subr.bf16.mxu0 0
        %821 = vmatpush1.bf16.msra.mxu0 0
        %822 = vmatprep.subr.bf16.mxu0 0
        %823 = vmatpush1.bf16.msra.mxu0 %v806
        %824 = vmatprep.subr.bf16.mxu0 0
        %825 = vmatpush1.bf16.msra.mxu0 %v805
        %826 = vmatprep.subr.bf16.mxu0 0
        %827 = vmatpush1.bf16.msra.mxu0 %v804
        %828 = vmatprep.subr.bf16.mxu0 0
        %829 = vmatpush1.bf16.msra.mxu0 %v803
        %830 = vmatprep.subr.bf16.mxu0 0
        %831 = vmatpush2.bf16.msra.mxu0 0
        %832 = vmatprep.subr.bf16.mxu0 0
        %833 = vmatpush2.bf16.msra.mxu0 0
        %834 = vmatprep.subr.bf16.mxu0 0
        %835 = vmatpush2.bf16.msra.mxu0 0
        %836 = vmatprep.subr.bf16.mxu0 0
        %837 = vmatpush2.bf16.msra.mxu0 0
        %838 = vmatprep.subr.bf16.mxu0 0
        %839 = vmatpush2.bf16.msra.mxu0 0
        %840 = vmatprep.subr.bf16.mxu0 0
        %841 = vmatpush2.bf16.msra.mxu0 0
        %842 = vmatprep.subr.bf16.mxu0 0
        %843 = vmatpush2.bf16.msra.mxu0 0
        %844 = vmatprep.subr.bf16.mxu0 0
        %845 = vmatpush2.bf16.msra.mxu0 0
        %846 = vmatprep.mubr.bf16.mxu0 0
        %847 = vmatmul.mubr.bf16.gmra.mxu0 %v812
        %v848 = vpop.f32.mrf.mxu0
        %v849 = vadd.f32 %v309, %v848
        %v850 = vpop.f32.mrf.mxu0
        %v851 = vpop.f32.mrf.mxu0
        %v852 = vadd.f32 %v309, %v851
        %v853 = vpop.f32.mrf.mxu0
        %854 = vdwg.mxu0
        %v855 = vadd.f32 %v414, %v849
        %v856 = vadd.f32 %v417, %v852
        %v857 = vsel %vm472, %v855, 0.0
        %858 = vadd.xlane.f32.xlu0 %v857
        %v859 = vpop.xlane.xlu0 %858
        %v860 = vsel %vm472, %v856, 0.0
        %861 = vadd.xlane.f32.xlu0 %v860
        %v862 = vpop.xlane.xlu0 %861
        %v863 = vrcp.pop 64.0
        %v864 = vmul.f32 %v859, %v863
        %v865 = vmul.f32 %v862, %v863
        %v866 = vsub.f32 %v855, %v864
        %v867 = vsub.f32 %v856, %v865
        %v868 = vmul.f32 %v866, %v866
        %v869 = vmul.f32 %v867, %v867
        %v870 = vsel %vm472, %v868, 0.0
        %871 = vadd.xlane.f32.xlu0 %v870
        %v872 = vpop.xlane.xlu0 %871
        %v873 = vsel %vm472, %v869, 0.0
        %874 = vadd.xlane.f32.xlu0 %v873
        %v875 = vpop.xlane.xlu0 %874
        %v876 = vmul.f32 %v872, %v863
        %v877 = vmul.f32 %v875, %v863
        %v878 = vadd.f32 %v876, 1e-12
        %v879 = vadd.f32 %v877, 1e-12
        %v880 = vrsqrt.pop %v878
        %v881 = vrsqrt.pop %v879
        %v882 = vmul.f32 %v866, %v880
        %v883 = vmul.f32 %v867, %v881
        %v884 = vmul.f32 %v882, %v310
        %v885 = vmul.f32 %v883, %v310
        %v886 = vadd.f32 %v884, %v311
        %v887 = vadd.f32 %v885, %v311
        %v888 = vpack.c.bf16 %v887, %v886
        %v897 = vunpack.c.l.b16 %v264
        %v898 = vunpack.c.l.b16 %v265
        %v899 = vunpack.c.l.b16 %v266
        %v900 = vunpack.c.l.b16 %v267
        %v901 = vunpack.c.l.b16 %v268
        %v902 = vunpack.c.l.b16 %v269
        %v903 = vunpack.c.l.b16 %v270
        %v904 = vunpack.c.l.b16 %v271
        %v905 = vpack.c.b16 %v898, %v897
        %v906 = vpack.c.b16 %v900, %v899
        %v907 = vpack.c.b16 %v902, %v901
        %v908 = vpack.c.b16 %v904, %v903
        %v914 = vsel %vm472, %v888, 0
        %916 = vmatprep.subr.bf16.mxu0 0
        %917 = vmatpush1.bf16.msra.mxu0 0
        %918 = vmatprep.subr.bf16.mxu0 0
        %919 = vmatpush1.bf16.msra.mxu0 0
        %920 = vmatprep.subr.bf16.mxu0 0
        %921 = vmatpush1.bf16.msra.mxu0 0
        %922 = vmatprep.subr.bf16.mxu0 0
        %923 = vmatpush1.bf16.msra.mxu0 0
        %924 = vmatprep.subr.bf16.mxu0 0
        %925 = vmatpush1.bf16.msra.mxu0 %v908
        %926 = vmatprep.subr.bf16.mxu0 0
        %927 = vmatpush1.bf16.msra.mxu0 %v907
        %928 = vmatprep.subr.bf16.mxu0 0
        %929 = vmatpush1.bf16.msra.mxu0 %v906
        %930 = vmatprep.subr.bf16.mxu0 0
        %931 = vmatpush1.bf16.msra.mxu0 %v905
        %932 = vmatprep.subr.bf16.mxu0 0
        %933 = vmatpush2.bf16.msra.mxu0 0
        %934 = vmatprep.subr.bf16.mxu0 0
        %935 = vmatpush2.bf16.msra.mxu0 0
        %936 = vmatprep.subr.bf16.mxu0 0
        %937 = vmatpush2.bf16.msra.mxu0 0
        %938 = vmatprep.subr.bf16.mxu0 0
        %939 = vmatpush2.bf16.msra.mxu0 0
        %940 = vmatprep.subr.bf16.mxu0 0
        %941 = vmatpush2.bf16.msra.mxu0 0
        %942 = vmatprep.subr.bf16.mxu0 0
        %943 = vmatpush2.bf16.msra.mxu0 0
        %944 = vmatprep.subr.bf16.mxu0 0
        %945 = vmatpush2.bf16.msra.mxu0 0
        %946 = vmatprep.subr.bf16.mxu0 0
        %947 = vmatpush2.bf16.msra.mxu0 0
        %948 = vmatprep.mubr.bf16.mxu0 0
        %949 = vmatmul.mubr.bf16.gmra.mxu0 %v914
        %v950 = vpop.f32.mrf.mxu0
        %v951 = vadd.f32 %v312, %v950
        %v952 = vpop.f32.mrf.mxu0
        %v953 = vpop.f32.mrf.mxu0
        %v954 = vadd.f32 %v312, %v953
        %v955 = vpop.f32.mrf.mxu0
        %956 = vdwg.mxu0
        %v957 = vmul.f32 %v951, 0.5
        %v958 = vmul.f32 %v954, 0.5
        %v959 = vmul.f32 %v951, 0.044715
        %v960 = vmul.f32 %v954, 0.044715
        %v961 = vmul.f32 %v959, %v951
        %v962 = vmul.f32 %v960, %v954
        %v963 = vmul.f32 %v961, %v951
        %v964 = vmul.f32 %v962, %v954
        %v965 = vadd.f32 %v951, %v963
        %v966 = vadd.f32 %v954, %v964
        %v967 = vmul.f32 %v965, 0.7978846
        %v968 = vmul.f32 %v966, 0.7978846
        %v969 = vtanh.pop %v967
        %v970 = vtanh.pop %v968
        %v971 = vadd.f32 %v969, 1.0
        %v972 = vadd.f32 %v970, 1.0
        %v973 = vmul.f32 %v957, %v971
        %v974 = vmul.f32 %v958, %v972
        %v975 = vpack.c.bf16 %v974, %v973
        %v992 = vunpack.c.l.b16 %v272
        %v993 = vunpack.c.l.b16 %v273
        %v994 = vunpack.c.l.b16 %v274
        %v995 = vunpack.c.l.b16 %v275
        %v996 = vunpack.c.l.b16 %v276
        %v997 = vunpack.c.l.b16 %v277
        %v998 = vunpack.c.l.b16 %v278
        %v999 = vunpack.c.l.b16 %v279
        %v1000 = vunpack.c.l.b16 %v280
        %v1001 = vunpack.c.l.b16 %v281
        %v1002 = vunpack.c.l.b16 %v282
        %v1003 = vunpack.c.l.b16 %v283
        %v1004 = vunpack.c.l.b16 %v284
        %v1005 = vunpack.c.l.b16 %v285
        %v1006 = vunpack.c.l.b16 %v286
        %v1007 = vunpack.c.l.b16 %v287
        %v1008 = vpack.c.b16 %v993, %v992
        %v1009 = vpack.c.b16 %v995, %v994
        %v1010 = vpack.c.b16 %v997, %v996
        %v1011 = vpack.c.b16 %v999, %v998
        %v1012 = vpack.c.b16 %v1001, %v1000
        %v1013 = vpack.c.b16 %v1003, %v1002
        %v1014 = vpack.c.b16 %v1005, %v1004
        %v1015 = vpack.c.b16 %v1007, %v1006
        %1024 = vmatprep.subr.bf16.mxu0 0
        %1025 = vmatpush1.bf16.msra.mxu0 %v1015
        %1026 = vmatprep.subr.bf16.mxu0 0
        %1027 = vmatpush1.bf16.msra.mxu0 %v1014
        %1028 = vmatprep.subr.bf16.mxu0 0
        %1029 = vmatpush1.bf16.msra.mxu0 %v1013
        %1030 = vmatprep.subr.bf16.mxu0 0
        %1031 = vmatpush1.bf16.msra.mxu0 %v1012
        %1032 = vmatprep.subr.bf16.mxu0 0
        %1033 = vmatpush1.bf16.msra.mxu0 %v1011
        %1034 = vmatprep.subr.bf16.mxu0 0
        %1035 = vmatpush1.bf16.msra.mxu0 %v1010
        %1036 = vmatprep.subr.bf16.mxu0 0
        %1037 = vmatpush1.bf16.msra.mxu0 %v1009
        %1038 = vmatprep.subr.bf16.mxu0 0
        %1039 = vmatpush1.bf16.msra.mxu0 %v1008
        %1040 = vmatprep.subr.bf16.mxu0 0
        %1041 = vmatpush2.bf16.msra.mxu0 0
        %1042 = vmatprep.subr.bf16.mxu0 0
        %1043 = vmatpush2.bf16.msra.mxu0 0
        %1044 = vmatprep.subr.bf16.mxu0 0
        %1045 = vmatpush2.bf16.msra.mxu0 0
        %1046 = vmatprep.subr.bf16.mxu0 0
        %1047 = vmatpush2.bf16.msra.mxu0 0
        %1048 = vmatprep.subr.bf16.mxu0 0
        %1049 = vmatpush2.bf16.msra.mxu0 0
        %1050 = vmatprep.subr.bf16.mxu0 0
        %1051 = vmatpush2.bf16.msra.mxu0 0
        %1052 = vmatprep.subr.bf16.mxu0 0
        %1053 = vmatpush2.bf16.msra.mxu0 0
        %1054 = vmatprep.subr.bf16.mxu0 0
        %1055 = vmatpush2.bf16.msra.mxu0 0
        %1056 = vmatprep.mubr.bf16.mxu0 0
        %1057 = vmatmul.mubr.bf16.gmra.mxu0 %v975
        %v1058 = vpop.f32.mrf.mxu0
        %v1059 = vadd.f32 %v313, %v1058
        %v1060 = vpop.f32.mrf.mxu0
        %v1061 = vpop.f32.mrf.mxu0
        %v1062 = vadd.f32 %v313, %v1061
        %v1063 = vpop.f32.mrf.mxu0
        %1064 = vdwg.mxu0
        %v1065 = vadd.f32 %v886, %v1059
        %v1066 = vadd.f32 %v887, %v1062
        %v1067 = vsel %vm472, %v1065, 0.0
        %1068 = vadd.xlane.f32.xlu0 %v1067
        %v1069 = vpop.xlane.xlu0 %1068
        %v1070 = vsel %vm472, %v1066, 0.0
        %1071 = vadd.xlane.f32.xlu0 %v1070
        %v1072 = vpop.xlane.xlu0 %1071
        %v1073 = vmul.f32 %v1069, %v863
        %v1074 = vmul.f32 %v1072, %v863
        %v1075 = vsub.f32 %v1065, %v1073
        %v1076 = vsub.f32 %v1066, %v1074
        %v1077 = vmul.f32 %v1075, %v1075
        %v1078 = vmul.f32 %v1076, %v1076
        %v1079 = vsel %vm472, %v1077, 0.0
        %1080 = vadd.xlane.f32.xlu0 %v1079
        %v1081 = vpop.xlane.xlu0 %1080
        %v1082 = vsel %vm472, %v1078, 0.0
        %1083 = vadd.xlane.f32.xlu0 %v1082
        %v1084 = vpop.xlane.xlu0 %1083
        %v1085 = vmul.f32 %v1081, %v863
        %v1086 = vmul.f32 %v1084, %v863
        %v1087 = vadd.f32 %v1085, 1e-12
        %v1088 = vadd.f32 %v1086, 1e-12
        %v1089 = vrsqrt.pop %v1087
        %v1090 = vrsqrt.pop %v1088
        %v1091 = vmul.f32 %v1075, %v1089
        %v1092 = vmul.f32 %v1076, %v1090
        %v1093 = vmul.f32 %v1091, %v314
        %v1094 = vmul.f32 %v1092, %v314
        %v1095 = vadd.f32 %v1093, %v315
        %v1096 = vadd.f32 %v1094, %v315
        %v1097 = vpack.c.bf16 %v1096, %v1095
        %v1099 = vsel %vm472, %v1097, 0
        %1101 = vmatprep.subr.bf16.mxu0 0
        %1102 = vmatpush1.bf16.msra.mxu0 0
        %1103 = vmatprep.subr.bf16.mxu0 0
        %1104 = vmatpush1.bf16.msra.mxu0 0
        %1105 = vmatprep.subr.bf16.mxu0 0
        %1106 = vmatpush1.bf16.msra.mxu0 0
        %1107 = vmatprep.subr.bf16.mxu0 0
        %1108 = vmatpush1.bf16.msra.mxu0 0
        %1109 = vmatprep.subr.bf16.mxu0 %v463
        %1110 = vmatpush1.bf16.msra.mxu0 %v462
        %1111 = vmatprep.subr.bf16.mxu0 %v461
        %1112 = vmatpush1.bf16.msra.mxu0 %v460
        %1113 = vmatprep.subr.bf16.mxu0 %v459
        %1114 = vmatpush1.bf16.msra.mxu0 %v458
        %1115 = vmatprep.subr.bf16.mxu0 %v457
        %1116 = vmatpush1.bf16.msra.mxu0 %v456
        %1117 = vmatprep.subr.bf16.mxu0 0
        %1118 = vmatpush2.bf16.msra.mxu0 0
        %1119 = vmatprep.subr.bf16.mxu0 0
        %1120 = vmatpush2.bf16.msra.mxu0 0
        %1121 = vmatprep.subr.bf16.mxu0 0
        %1122 = vmatpush2.bf16.msra.mxu0 0
        %1123 = vmatprep.subr.bf16.mxu0 0
        %1124 = vmatpush2.bf16.msra.mxu0 0
        %1125 = vmatprep.subr.bf16.mxu0 0
        %1126 = vmatpush2.bf16.msra.mxu0 0
        %1127 = vmatprep.subr.bf16.mxu0 0
        %1128 = vmatpush2.bf16.msra.mxu0 0
        %1129 = vmatprep.subr.bf16.mxu0 0
        %1130 = vmatpush2.bf16.msra.mxu0 0
        %1131 = vmatprep.subr.bf16.mxu0 0
        %1132 = vmatpush2.bf16.msra.mxu0 0
        %1133 = vmatprep.mubr.bf16.mxu0 0
        %1134 = vmatmul.mubr.bf16.gmra.mxu0 %v1099
        %v1135 = vpop.f32.mrf.mxu0
        %v1136 = vadd.f32 %v425, %v1135
        %v1137 = vpop.f32.mrf.mxu0
        %v1138 = vadd.f32 %v429, %v1137
        %v1139 = vpop.f32.mrf.mxu0
        %v1140 = vadd.f32 %v425, %v1139
        %v1141 = vpop.f32.mrf.mxu0
        %v1142 = vadd.f32 %v429, %v1141
        %1143 = vdwg.mxu0
        %v1144 = vmul.f32 %v1136, %v528
        %v1145 = vmul.f32 %v1140, %v530
        %v1146 = vmul.f32 %v1136, %v532
        %v1147 = vmul.f32 %v1140, %v534
        %v1148 = vmul.f32 %v1136, %v536
        %v1149 = vmul.f32 %v1140, %v538
        %v1150 = vmul.f32 %v1136, %v540
        %v1151 = vmul.f32 %v1140, %v542
        %v1152 = vmul.f32 %v1138, %v318
        %v1153 = vmul.f32 %v1142, %v319
        %v1154 = vmul.f32 %v1138, %v320
        %v1155 = vmul.f32 %v1142, %v321
        %v1156 = vmul.f32 %v1138, %v322
        %v1157 = vmul.f32 %v1142, %v323
        %v1158 = vmul.f32 %v1138, %v324
        %v1159 = vmul.f32 %v1142, %v325
        %v1160 = vpack.c.bf16 %v1140, %v1136
        %v1161 = vpack.c.bf16 %v1145, %v1144
        %v1162 = vpack.c.bf16 %v1147, %v1146
        %v1163 = vpack.c.bf16 %v1149, %v1148
        %v1164 = vpack.c.bf16 %v1151, %v1150
        %1169 = vrot.lane.b32.xlu0 %v1161, 64
        %v1170 = vpop.permute.xlu0 %1169
        %1171 = vrot.lane.b32.xlu0 %v1162, 64
        %v1172 = vpop.permute.xlu0 %1171
        %1173 = vrot.lane.b32.xlu0 %v1163, 64
        %v1174 = vpop.permute.xlu0 %1173
        %1175 = vrot.lane.b32.xlu0 %v1164, 64
        %v1176 = vpop.permute.xlu0 %1175
        %v1178 = vsel %vm472, %v1160, 0
        %v1181 = vsel %vm472, %v1170, 0
        %v1184 = vsel %vm472, %v1172, 0
        %v1187 = vsel %vm472, %v1174, 0
        %v1190 = vsel %vm472, %v1176, 0
        %1192 = vmatprep.subr.bf16.mxu0 0
        %1193 = vmatpush1.bf16.xpose.msra.mxu0 0
        %1194 = vmatprep.subr.bf16.mxu0 0
        %1195 = vmatpush1.bf16.xpose.msra.mxu0 0
        %1196 = vmatprep.subr.bf16.mxu0 0
        %1197 = vmatpush1.bf16.xpose.msra.mxu0 0
        %1198 = vmatprep.subr.bf16.mxu0 0
        %1199 = vmatpush1.bf16.xpose.msra.mxu0 0
        %1200 = vmatprep.subr.bf16.mxu0 0
        %1201 = vmatpush1.bf16.xpose.msra.mxu0 %v1190
        %1202 = vmatprep.subr.bf16.mxu0 0
        %1203 = vmatpush1.bf16.xpose.msra.mxu0 %v1187
        %1204 = vmatprep.subr.bf16.mxu0 0
        %1205 = vmatpush1.bf16.xpose.msra.mxu0 %v1184
        %1206 = vmatprep.subr.bf16.mxu0 0
        %1207 = vmatpush1.bf16.xpose.msra.mxu0 %v1181
        %1208 = vmatprep.subr.bf16.mxu0 0
        %1209 = vmatpush2.bf16.xpose.msra.mxu0 0
        %1210 = vmatprep.subr.bf16.mxu0 0
        %1211 = vmatpush2.bf16.xpose.msra.mxu0 0
        %1212 = vmatprep.subr.bf16.mxu0 0
        %1213 = vmatpush2.bf16.xpose.msra.mxu0 0
        %1214 = vmatprep.subr.bf16.mxu0 0
        %1215 = vmatpush2.bf16.xpose.msra.mxu0 0
        %1216 = vmatprep.subr.bf16.mxu0 0
        %1217 = vmatpush2.bf16.xpose.msra.mxu0 0
        %1218 = vmatprep.subr.bf16.mxu0 0
        %1219 = vmatpush2.bf16.xpose.msra.mxu0 0
        %1220 = vmatprep.subr.bf16.mxu0 0
        %1221 = vmatpush2.bf16.xpose.msra.mxu0 0
        %1222 = vmatprep.subr.bf16.mxu0 0
        %1223 = vmatpush2.bf16.xpose.msra.mxu0 0
        %1224 = vmatprep.mubr.bf16.mxu0 0
        %1225 = vmatmul.mubr.bf16.gmra.mxu0 %v1178
        %v1226 = vpop.f32.mrf.mxu0
        %v1227 = vadd.f32 %v327, %v1226
        %v1228 = vpop.f32.mrf.mxu0
        %v1229 = vpop.f32.mrf.mxu0
        %v1230 = vadd.f32 %v328, %v1229
        %v1231 = vpop.f32.mrf.mxu0
        %1232 = vdwg.mxu0
        %v1233 = vsel %vm472, %v1227, -inf
        %1234 = vmax.xlane.f32.xlu0 %v1233
        %v1235 = vpop.xlane.xlu0 %1234
        %v1236 = vsel %vm472, %v1230, -inf
        %1237 = vmax.xlane.f32.xlu0 %v1236
        %v1238 = vpop.xlane.xlu0 %1237
        %v1239 = vsub.f32 %v1227, %v1235
        %v1240 = vsub.f32 %v1230, %v1238
        %v1241 = vmul.f32 %v1239, 1.442695
        %v1242 = vpow.pop %v1241
        %v1243 = vmul.f32 %v1240, 1.442695
        %v1244 = vpow.pop %v1243
        %v1246 = vsel %vm472, %v1242, 0
        %v1249 = vsel %vm472, %v1244, 0
        %1251 = vmatprep.subr.mxu0 0.0
        %1252 = vmatpush1.msra.mxu0 0.0
        %1253 = vmatprep.subr.mxu0 0.0
        %1254 = vmatpush1.msra.mxu0 0.0
        %1255 = vmatprep.subr.mxu0 0.0
        %1256 = vmatpush1.msra.mxu0 0.0
        %1257 = vmatprep.subr.mxu0 0.0
        %1258 = vmatpush1.msra.mxu0 0.0
        %1259 = vmatprep.subr.mxu0 0.0
        %1260 = vmatpush1.msra.mxu0 0.0
        %1261 = vmatprep.subr.mxu0 0.0
        %1262 = vmatpush1.msra.mxu0 0.0
        %1263 = vmatprep.subr.mxu0 0.0
        %1264 = vmatpush1.msra.mxu0 0.0
        %1265 = vmatprep.subr.mxu0 0.0
        %1266 = vmatpush1.msra.mxu0 0.0
        %1267 = vmatprep.subr.mxu0 0.0
        %1268 = vmatpush1.msra.mxu0 %v542
        %1269 = vmatprep.subr.mxu0 0.0
        %1270 = vmatpush1.msra.mxu0 %v540
        %1271 = vmatprep.subr.mxu0 0.0
        %1272 = vmatpush1.msra.mxu0 %v538
        %1273 = vmatprep.subr.mxu0 0.0
        %1274 = vmatpush1.msra.mxu0 %v536
        %1275 = vmatprep.subr.mxu0 0.0
        %1276 = vmatpush1.msra.mxu0 %v534
        %1277 = vmatprep.subr.mxu0 0.0
        %1278 = vmatpush1.msra.mxu0 %v532
        %1279 = vmatprep.subr.mxu0 0.0
        %1280 = vmatpush1.msra.mxu0 %v530
        %1281 = vmatprep.subr.mxu0 0.0
        %1282 = vmatpush1.msra.mxu0 %v528
        %1283 = vmatprep.subr.mxu0 0.0
        %1284 = vmatpush2.msra.mxu0 0.0
        %1285 = vmatprep.subr.mxu0 0.0
        %1286 = vmatpush2.msra.mxu0 0.0
        %1287 = vmatprep.subr.mxu0 0.0
        %1288 = vmatpush2.msra.mxu0 0.0
        %1289 = vmatprep.subr.mxu0 0.0
        %1290 = vmatpush2.msra.mxu0 0.0
        %1291 = vmatprep.subr.mxu0 0.0
        %1292 = vmatpush2.msra.mxu0 0.0
        %1293 = vmatprep.subr.mxu0 0.0
        %1294 = vmatpush2.msra.mxu0 0.0
        %1295 = vmatprep.subr.mxu0 0.0
        %1296 = vmatpush2.msra.mxu0 0.0
        %1297 = vmatprep.subr.mxu0 0.0
        %1298 = vmatpush2.msra.mxu0 0.0
        %1299 = vmatprep.subr.mxu0 0.0
        %1300 = vmatpush2.msra.mxu0 0.0
        %1301 = vmatprep.subr.mxu0 0.0
        %1302 = vmatpush2.msra.mxu0 0.0
        %1303 = vmatprep.subr.mxu0 0.0
        %1304 = vmatpush2.msra.mxu0 0.0
        %1305 = vmatprep.subr.mxu0 0.0
        %1306 = vmatpush2.msra.mxu0 0.0
        %1307 = vmatprep.subr.mxu0 0.0
        %1308 = vmatpush2.msra.mxu0 0.0
        %1309 = vmatprep.subr.mxu0 0.0
        %1310 = vmatpush2.msra.mxu0 0.0
        %1311 = vmatprep.subr.mxu0 0.0
        %1312 = vmatpush2.msra.mxu0 0.0
        %1313 = vmatprep.subr.mxu0 0.0
        %1314 = vmatpush2.msra.mxu0 0.0
        %1315 = vmatprep.mubr.f32.mxu0 0.0
        %1316 = vmatmul.mubr.f32.gmra.mxu0 %v1246
        %v1317 = vpop.f32.mrf.mxu0
        %v1318 = vadd.f32 0.0, %v1317
        %v1319 = vpop.f32.mrf.mxu0
        %1320 = vmatprep.mubr.f32.mxu0 0.0
        %1321 = vmatmul.mubr.f32.gmra.mxu0 %v1249
        %v1322 = vpop.f32.mrf.mxu0
        %v1323 = vadd.f32 0.0, %v1322
        %v1324 = vpop.f32.mrf.mxu0
        %1325 = vdwg.mxu0
        %v1326 = vrcp.pop %v1318
        %v1327 = vmul.f32 %v1242, %v1326
        %v1328 = vrcp.pop %v1323
        %v1329 = vmul.f32 %v1244, %v1328
        %v1330 = vpack.c.bf16 %v1329, %v1327
        %v1331 = vpack.c.bf16 %v1153, %v1152
        %v1332 = vpack.c.bf16 %v1155, %v1154
        %v1333 = vpack.c.bf16 %v1157, %v1156
        %v1334 = vpack.c.bf16 %v1159, %v1158
        %v1336 = vsel %vm472, %v1330, 0
        %1338 = vmatprep.subr.bf16.mxu0 0
        %1339 = vmatpush1.bf16.msra.mxu0 0
        %1340 = vmatprep.subr.bf16.mxu0 0
        %1341 = vmatpush1.bf16.msra.mxu0 0
        %1342 = vmatprep.subr.bf16.mxu0 0
        %1343 = vmatpush1.bf16.msra.mxu0 0
        %1344 = vmatprep.subr.bf16.mxu0 0
        %1345 = vmatpush1.bf16.msra.mxu0 0
        %1346 = vmatprep.subr.bf16.mxu0 0
        %1347 = vmatpush1.bf16.msra.mxu0 %v1334
        %1348 = vmatprep.subr.bf16.mxu0 0
        %1349 = vmatpush1.bf16.msra.mxu0 %v1333
        %1350 = vmatprep.subr.bf16.mxu0 0
        %1351 = vmatpush1.bf16.msra.mxu0 %v1332
        %1352 = vmatprep.subr.bf16.mxu0 0
        %1353 = vmatpush1.bf16.msra.mxu0 %v1331
        %1354 = vmatprep.subr.bf16.mxu0 0
        %1355 = vmatpush2.bf16.msra.mxu0 0
        %1356 = vmatprep.subr.bf16.mxu0 0
        %1357 = vmatpush2.bf16.msra.mxu0 0
        %1358 = vmatprep.subr.bf16.mxu0 0
        %1359 = vmatpush2.bf16.msra.mxu0 0
        %1360 = vmatprep.subr.bf16.mxu0 0
        %1361 = vmatpush2.bf16.msra.mxu0 0
        %1362 = vmatprep.subr.bf16.mxu0 0
        %1363 = vmatpush2.bf16.msra.mxu0 0
        %1364 = vmatprep.subr.bf16.mxu0 0
        %1365 = vmatpush2.bf16.msra.mxu0 0
        %1366 = vmatprep.subr.bf16.mxu0 0
        %1367 = vmatpush2.bf16.msra.mxu0 0
        %1368 = vmatprep.subr.bf16.mxu0 0
        %1369 = vmatpush2.bf16.msra.mxu0 0
        %1370 = vmatprep.mubr.bf16.mxu0 0
        %1371 = vmatmul.mubr.bf16.gmra.mxu0 %v1336
        %v1372 = vpop.f32.mrf.mxu0
        %v1373 = vadd.f32 0.0, %v1372
        %v1374 = vpop.f32.mrf.mxu0
        %v1375 = vpop.f32.mrf.mxu0
        %v1376 = vadd.f32 0.0, %v1375
        %v1377 = vpop.f32.mrf.mxu0
        %1378 = vdwg.mxu0
        %v1379 = vpack.c.bf16 %v1376, %v1373
        %v1381 = vsel %vm472, %v1379, 0
        %1383 = vmatprep.subr.bf16.mxu0 0
        %1384 = vmatpush1.bf16.msra.mxu0 0
        %1385 = vmatprep.subr.bf16.mxu0 0
        %1386 = vmatpush1.bf16.msra.mxu0 0
        %1387 = vmatprep.subr.bf16.mxu0 0
        %1388 = vmatpush1.bf16.msra.mxu0 0
        %1389 = vmatprep.subr.bf16.mxu0 0
        %1390 = vmatpush1.bf16.msra.mxu0 0
        %1391 = vmatprep.subr.bf16.mxu0 0
        %1392 = vmatpush1.bf16.msra.mxu0 %v806
        %1393 = vmatprep.subr.bf16.mxu0 0
        %1394 = vmatpush1.bf16.msra.mxu0 %v805
        %1395 = vmatprep.subr.bf16.mxu0 0
        %1396 = vmatpush1.bf16.msra.mxu0 %v804
        %1397 = vmatprep.subr.bf16.mxu0 0
        %1398 = vmatpush1.bf16.msra.mxu0 %v803
        %1399 = vmatprep.subr.bf16.mxu0 0
        %1400 = vmatpush2.bf16.msra.mxu0 0
        %1401 = vmatprep.subr.bf16.mxu0 0
        %1402 = vmatpush2.bf16.msra.mxu0 0
        %1403 = vmatprep.subr.bf16.mxu0 0
        %1404 = vmatpush2.bf16.msra.mxu0 0
        %1405 = vmatprep.subr.bf16.mxu0 0
        %1406 = vmatpush2.bf16.msra.mxu0 0
        %1407 = vmatprep.subr.bf16.mxu0 0
        %1408 = vmatpush2.bf16.msra.mxu0 0
        %1409 = vmatprep.subr.bf16.mxu0 0
        %1410 = vmatpush2.bf16.msra.mxu0 0
        %1411 = vmatprep.subr.bf16.mxu0 0
        %1412 = vmatpush2.bf16.msra.mxu0 0
        %1413 = vmatprep.subr.bf16.mxu0 0
        %1414 = vmatpush2.bf16.msra.mxu0 0
        %1415 = vmatprep.mubr.bf16.mxu0 0
        %1416 = vmatmul.mubr.bf16.gmra.mxu0 %v1381
        %v1417 = vpop.f32.mrf.mxu0
        %v1418 = vadd.f32 %v309, %v1417
        %v1419 = vpop.f32.mrf.mxu0
        %v1420 = vpop.f32.mrf.mxu0
        %v1421 = vadd.f32 %v309, %v1420
        %v1422 = vpop.f32.mrf.mxu0
        %1423 = vdwg.mxu0
        %v1424 = vadd.f32 %v1095, %v1418
        %v1425 = vadd.f32 %v1096, %v1421
        %v1426 = vsel %vm472, %v1424, 0.0
        %1427 = vadd.xlane.f32.xlu0 %v1426
        %v1428 = vpop.xlane.xlu0 %1427
        %v1429 = vsel %vm472, %v1425, 0.0
        %1430 = vadd.xlane.f32.xlu0 %v1429
        %v1431 = vpop.xlane.xlu0 %1430
        %v1432 = vmul.f32 %v1428, %v863
        %v1433 = vmul.f32 %v1431, %v863
        %v1434 = vsub.f32 %v1424, %v1432
        %v1435 = vsub.f32 %v1425, %v1433
        %v1436 = vmul.f32 %v1434, %v1434
        %v1437 = vmul.f32 %v1435, %v1435
        %v1438 = vsel %vm472, %v1436, 0.0
        %1439 = vadd.xlane.f32.xlu0 %v1438
        %v1440 = vpop.xlane.xlu0 %1439
        %v1441 = vsel %vm472, %v1437, 0.0
        %1442 = vadd.xlane.f32.xlu0 %v1441
        %v1443 = vpop.xlane.xlu0 %1442
        %v1444 = vmul.f32 %v1440, %v863
        %v1445 = vmul.f32 %v1443, %v863
        %v1446 = vadd.f32 %v1444, 1e-12
        %v1447 = vadd.f32 %v1445, 1e-12
        %v1448 = vrsqrt.pop %v1446
        %v1449 = vrsqrt.pop %v1447
        %v1450 = vmul.f32 %v1434, %v1448
        %v1451 = vmul.f32 %v1435, %v1449
        %v1452 = vmul.f32 %v1450, %v310
        %v1453 = vmul.f32 %v1451, %v310
        %v1454 = vadd.f32 %v1452, %v311
        %v1455 = vadd.f32 %v1453, %v311
        %v1456 = vpack.c.bf16 %v1455, %v1454
        %v1458 = vsel %vm472, %v1456, 0
        %1460 = vmatprep.subr.bf16.mxu0 0
        %1461 = vmatpush1.bf16.msra.mxu0 0
        %1462 = vmatprep.subr.bf16.mxu0 0
        %1463 = vmatpush1.bf16.msra.mxu0 0
        %1464 = vmatprep.subr.bf16.mxu0 0
        %1465 = vmatpush1.bf16.msra.mxu0 0
        %1466 = vmatprep.subr.bf16.mxu0 0
        %1467 = vmatpush1.bf16.msra.mxu0 0
        %1468 = vmatprep.subr.bf16.mxu0 0
        %1469 = vmatpush1.bf16.msra.mxu0 %v908
        %1470 = vmatprep.subr.bf16.mxu0 0
        %1471 = vmatpush1.bf16.msra.mxu0 %v907
        %1472 = vmatprep.subr.bf16.mxu0 0
        %1473 = vmatpush1.bf16.msra.mxu0 %v906
        %1474 = vmatprep.subr.bf16.mxu0 0
        %1475 = vmatpush1.bf16.msra.mxu0 %v905
        %1476 = vmatprep.subr.bf16.mxu0 0
        %1477 = vmatpush2.bf16.msra.mxu0 0
        %1478 = vmatprep.subr.bf16.mxu0 0
        %1479 = vmatpush2.bf16.msra.mxu0 0
        %1480 = vmatprep.subr.bf16.mxu0 0
        %1481 = vmatpush2.bf16.msra.mxu0 0
        %1482 = vmatprep.subr.bf16.mxu0 0
        %1483 = vmatpush2.bf16.msra.mxu0 0
        %1484 = vmatprep.subr.bf16.mxu0 0
        %1485 = vmatpush2.bf16.msra.mxu0 0
        %1486 = vmatprep.subr.bf16.mxu0 0
        %1487 = vmatpush2.bf16.msra.mxu0 0
        %1488 = vmatprep.subr.bf16.mxu0 0
        %1489 = vmatpush2.bf16.msra.mxu0 0
        %1490 = vmatprep.subr.bf16.mxu0 0
        %1491 = vmatpush2.bf16.msra.mxu0 0
        %1492 = vmatprep.mubr.bf16.mxu0 0
        %1493 = vmatmul.mubr.bf16.gmra.mxu0 %v1458
        %v1494 = vpop.f32.mrf.mxu0
        %v1495 = vadd.f32 %v312, %v1494
        %v1496 = vpop.f32.mrf.mxu0
        %v1497 = vpop.f32.mrf.mxu0
        %v1498 = vadd.f32 %v312, %v1497
        %v1499 = vpop.f32.mrf.mxu0
        %1500 = vdwg.mxu0
        %v1501 = vmul.f32 %v1495, 0.5
        %v1502 = vmul.f32 %v1498, 0.5
        %v1503 = vmul.f32 %v1495, 0.044715
        %v1504 = vmul.f32 %v1498, 0.044715
        %v1505 = vmul.f32 %v1503, %v1495
        %v1506 = vmul.f32 %v1504, %v1498
        %v1507 = vmul.f32 %v1505, %v1495
        %v1508 = vmul.f32 %v1506, %v1498
        %v1509 = vadd.f32 %v1495, %v1507
        %v1510 = vadd.f32 %v1498, %v1508
        %v1511 = vmul.f32 %v1509, 0.7978846
        %v1512 = vmul.f32 %v1510, 0.7978846
        %v1513 = vtanh.pop %v1511
        %v1514 = vtanh.pop %v1512
        %v1515 = vadd.f32 %v1513, 1.0
        %v1516 = vadd.f32 %v1514, 1.0
        %v1517 = vmul.f32 %v1501, %v1515
        %v1518 = vmul.f32 %v1502, %v1516
        %v1519 = vpack.c.bf16 %v1518, %v1517
        %1520 = vmatprep.subr.bf16.mxu0 0
        %1521 = vmatpush1.bf16.msra.mxu0 %v1015
        %1522 = vmatprep.subr.bf16.mxu0 0
        %1523 = vmatpush1.bf16.msra.mxu0 %v1014
        %1524 = vmatprep.subr.bf16.mxu0 0
        %1525 = vmatpush1.bf16.msra.mxu0 %v1013
        %1526 = vmatprep.subr.bf16.mxu0 0
        %1527 = vmatpush1.bf16.msra.mxu0 %v1012
        %1528 = vmatprep.subr.bf16.mxu0 0
        %1529 = vmatpush1.bf16.msra.mxu0 %v1011
        %1530 = vmatprep.subr.bf16.mxu0 0
        %1531 = vmatpush1.bf16.msra.mxu0 %v1010
        %1532 = vmatprep.subr.bf16.mxu0 0
        %1533 = vmatpush1.bf16.msra.mxu0 %v1009
        %1534 = vmatprep.subr.bf16.mxu0 0
        %1535 = vmatpush1.bf16.msra.mxu0 %v1008
        %1536 = vmatprep.subr.bf16.mxu0 0
        %1537 = vmatpush2.bf16.msra.mxu0 0
        %1538 = vmatprep.subr.bf16.mxu0 0
        %1539 = vmatpush2.bf16.msra.mxu0 0
        %1540 = vmatprep.subr.bf16.mxu0 0
        %1541 = vmatpush2.bf16.msra.mxu0 0
        %1542 = vmatprep.subr.bf16.mxu0 0
        %1543 = vmatpush2.bf16.msra.mxu0 0
        %1544 = vmatprep.subr.bf16.mxu0 0
        %1545 = vmatpush2.bf16.msra.mxu0 0
        %1546 = vmatprep.subr.bf16.mxu0 0
        %1547 = vmatpush2.bf16.msra.mxu0 0
        %1548 = vmatprep.subr.bf16.mxu0 0
        %1549 = vmatpush2.bf16.msra.mxu0 0
        %1550 = vmatprep.subr.bf16.mxu0 0
        %1551 = vmatpush2.bf16.msra.mxu0 0
        %1552 = vmatprep.mubr.bf16.mxu0 0
        %1553 = vmatmul.mubr.bf16.gmra.mxu0 %v1519
        %v1554 = vpop.f32.mrf.mxu0
        %v1555 = vadd.f32 %v313, %v1554
        %v1556 = vpop.f32.mrf.mxu0
        %v1557 = vpop.f32.mrf.mxu0
        %v1558 = vadd.f32 %v313, %v1557
        %v1559 = vpop.f32.mrf.mxu0
        %1560 = vdwg.mxu0
        %v1561 = vadd.f32 %v1454, %v1555
        %v1562 = vadd.f32 %v1455, %v1558
        %v1563 = vsel %vm472, %v1561, 0.0
        %1564 = vadd.xlane.f32.xlu0 %v1563
        %v1565 = vpop.xlane.xlu0 %1564
        %v1566 = vsel %vm472, %v1562, 0.0
        %1567 = vadd.xlane.f32.xlu0 %v1566
        %v1568 = vpop.xlane.xlu0 %1567
        %v1569 = vmul.f32 %v1565, %v863
        %v1570 = vmul.f32 %v1568, %v863
        %v1571 = vsub.f32 %v1561, %v1569
        %v1572 = vsub.f32 %v1562, %v1570
        %v1573 = vmul.f32 %v1571, %v1571
        %v1574 = vmul.f32 %v1572, %v1572
        %v1575 = vsel %vm472, %v1573, 0.0
        %1576 = vadd.xlane.f32.xlu0 %v1575
        %v1577 = vpop.xlane.xlu0 %1576
        %v1578 = vsel %vm472, %v1574, 0.0
        %1579 = vadd.xlane.f32.xlu0 %v1578
        %v1580 = vpop.xlane.xlu0 %1579
        %v1581 = vmul.f32 %v1577, %v863
        %v1582 = vmul.f32 %v1580, %v863
        %v1583 = vadd.f32 %v1581, 1e-12
        %v1584 = vadd.f32 %v1582, 1e-12
        %v1585 = vrsqrt.pop %v1583
        %v1586 = vrsqrt.pop %v1584
        %v1587 = vmul.f32 %v1571, %v1585
        %v1588 = vmul.f32 %v1572, %v1586
        %v1589 = vmul.f32 %v1587, %v314
        %v1590 = vmul.f32 %v1588, %v314
        %v1591 = vadd.f32 %v1589, %v315
        %v1592 = vadd.f32 %v1590, %v315
        %vm1593 = vcmask 130048
        %v1595 = vsel %vm1593, %v326, 0
        %1597 = vmatprep.subr.mxu0 0.0
        %1598 = vmatpush1.msra.mxu0 0.0
        %1599 = vmatprep.subr.mxu0 0.0
        %1600 = vmatpush1.msra.mxu0 0.0
        %1601 = vmatprep.subr.mxu0 0.0
        %1602 = vmatpush1.msra.mxu0 0.0
        %1603 = vmatprep.subr.mxu0 0.0
        %1604 = vmatpush1.msra.mxu0 0.0
        %1605 = vmatprep.subr.mxu0 0.0
        %1606 = vmatpush1.msra.mxu0 0.0
        %1607 = vmatprep.subr.mxu0 0.0
        %1608 = vmatpush1.msra.mxu0 0.0
        %1609 = vmatprep.subr.mxu0 0.0
        %1610 = vmatpush1.msra.mxu0 0.0
        %1611 = vmatprep.subr.mxu0 0.0
        %1612 = vmatpush1.msra.mxu0 0.0
        %1613 = vmatprep.subr.mxu0 0.0
        %1614 = vmatpush1.msra.mxu0 0.0
        %1615 = vmatprep.subr.mxu0 0.0
        %1616 = vmatpush1.msra.mxu0 0.0
        %1617 = vmatprep.subr.mxu0 0.0
        %1618 = vmatpush1.msra.mxu0 0.0
        %1619 = vmatprep.subr.mxu0 0.0
        %1620 = vmatpush1.msra.mxu0 0.0
        %1621 = vmatprep.subr.mxu0 0.0
        %1622 = vmatpush1.msra.mxu0 0.0
        %1623 = vmatprep.subr.mxu0 0.0
        %1624 = vmatpush1.msra.mxu0 0.0
        %1625 = vmatprep.subr.mxu0 0.0
        %1626 = vmatpush1.msra.mxu0 %v1592
        %1627 = vmatprep.subr.mxu0 0.0
        %1628 = vmatpush1.msra.mxu0 %v1591
        %1629 = vmatprep.subr.mxu0 0.0
        %1630 = vmatpush2.msra.mxu0 0.0
        %1631 = vmatprep.subr.mxu0 0.0
        %1632 = vmatpush2.msra.mxu0 0.0
        %1633 = vmatprep.subr.mxu0 0.0
        %1634 = vmatpush2.msra.mxu0 0.0
        %1635 = vmatprep.subr.mxu0 0.0
        %1636 = vmatpush2.msra.mxu0 0.0
        %1637 = vmatprep.subr.mxu0 0.0
        %1638 = vmatpush2.msra.mxu0 0.0
        %1639 = vmatprep.subr.mxu0 0.0
        %1640 = vmatpush2.msra.mxu0 0.0
        %1641 = vmatprep.subr.mxu0 0.0
        %1642 = vmatpush2.msra.mxu0 0.0
        %1643 = vmatprep.subr.mxu0 0.0
        %1644 = vmatpush2.msra.mxu0 0.0
        %1645 = vmatprep.subr.mxu0 0.0
        %1646 = vmatpush2.msra.mxu0 0.0
        %1647 = vmatprep.subr.mxu0 0.0
        %1648 = vmatpush2.msra.mxu0 0.0
        %1649 = vmatprep.subr.mxu0 0.0
        %1650 = vmatpush2.msra.mxu0 0.0
        %1651 = vmatprep.subr.mxu0 0.0
        %1652 = vmatpush2.msra.mxu0 0.0
        %1653 = vmatprep.subr.mxu0 0.0
        %1654 = vmatpush2.msra.mxu0 0.0
        %1655 = vmatprep.subr.mxu0 0.0
        %1656 = vmatpush2.msra.mxu0 0.0
        %1657 = vmatprep.subr.mxu0 0.0
        %1658 = vmatpush2.msra.mxu0 0.0
        %1659 = vmatprep.subr.mxu0 0.0
        %1660 = vmatpush2.msra.mxu0 0.0
        %1661 = vmatprep.mubr.f32.mxu0 0.0
        %1662 = vmatmul.mubr.f32.gmra.mxu0 %v1595
        %v1663 = vpop.f32.mrf.mxu0
        %v1664 = vadd.f32 0.0, %v1663
        %v1665 = vpop.f32.mrf.mxu0
        %1666 = vdwg.mxu0
        %v1667 = vpack.c.bf16 %v1664, %v1664
        %v1676 = vunpack.c.l.b16 %v288
        %v1677 = vunpack.c.l.b16 %v289
        %v1678 = vunpack.c.l.b16 %v290
        %v1679 = vunpack.c.l.b16 %v291
        %v1680 = vunpack.c.l.b16 %v292
        %v1681 = vunpack.c.l.b16 %v293
        %v1682 = vunpack.c.l.b16 %v294
        %v1683 = vunpack.c.l.b16 %v295
        %v1684 = vpack.c.b16 %v1677, %v1676
        %v1685 = vpack.c.b16 %v1679, %v1678
        %v1686 = vpack.c.b16 %v1681, %v1680
        %v1687 = vpack.c.b16 %v1683, %v1682
        %v1693 = vsel %vm472, %v1667, 0
        %1695 = vmatprep.subr.bf16.mxu0 0
        %1696 = vmatpush1.bf16.msra.mxu0 0
        %1697 = vmatprep.subr.bf16.mxu0 0
        %1698 = vmatpush1.bf16.msra.mxu0 0
        %1699 = vmatprep.subr.bf16.mxu0 0
        %1700 = vmatpush1.bf16.msra.mxu0 0
        %1701 = vmatprep.subr.bf16.mxu0 0
        %1702 = vmatpush1.bf16.msra.mxu0 0
        %1703 = vmatprep.subr.bf16.mxu0 0
        %1704 = vmatpush1.bf16.msra.mxu0 %v1687
        %1705 = vmatprep.subr.bf16.mxu0 0
        %1706 = vmatpush1.bf16.msra.mxu0 %v1686
        %1707 = vmatprep.subr.bf16.mxu0 0
        %1708 = vmatpush1.bf16.msra.mxu0 %v1685
        %1709 = vmatprep.subr.bf16.mxu0 0
        %1710 = vmatpush1.bf16.msra.mxu0 %v1684
        %1711 = vmatprep.subr.bf16.mxu0 0
        %1712 = vmatpush2.bf16.msra.mxu0 0
        %1713 = vmatprep.subr.bf16.mxu0 0
        %1714 = vmatpush2.bf16.msra.mxu0 0
        %1715 = vmatprep.subr.bf16.mxu0 0
        %1716 = vmatpush2.bf16.msra.mxu0 0
        %1717 = vmatprep.subr.bf16.mxu0 0
        %1718 = vmatpush2.bf16.msra.mxu0 0
        %1719 = vmatprep.subr.bf16.mxu0 0
        %1720 = vmatpush2.bf16.msra.mxu0 0
        %1721 = vmatprep.subr.bf16.mxu0 0
        %1722 = vmatpush2.bf16.msra.mxu0 0
        %1723 = vmatprep.subr.bf16.mxu0 0
        %1724 = vmatpush2.bf16.msra.mxu0 0
        %1725 = vmatprep.subr.bf16.mxu0 0
        %1726 = vmatpush2.bf16.msra.mxu0 0
        %1727 = vmatprep.mubr.bf16.mxu0 0
        %1728 = vmatmul.mubr.bf16.gmra.mxu0 %v1693
        %v1729 = vpop.f32.mrf.mxu0
        %v1730 = vadd.f32 %v316, %v1729
        %v1731 = vpop.f32.mrf.mxu0
        %v1732 = vpop.f32.mrf.mxu0
        %v1733 = vpop.f32.mrf.mxu0
        %1734 = vdwg.mxu0
        %v1735 = vtanh.pop %v1730
        %v1736 = vpack.c.bf16 %v1735, %v1735
        %v1745 = vunpack.c.l.b16 %v296
        %v1746 = vunpack.c.l.b16 %v297
        %v1747 = vunpack.c.l.b16 %v298
        %v1748 = vunpack.c.l.b16 %v299
        %v1749 = vunpack.c.l.b16 %v300
        %v1750 = vunpack.c.l.b16 %v301
        %v1751 = vunpack.c.l.b16 %v302
        %v1752 = vunpack.c.l.b16 %v303
        %v1753 = vpack.c.b16 %v1746, %v1745
        %v1754 = vpack.c.b16 %v1748, %v1747
        %v1755 = vpack.c.b16 %v1750, %v1749
        %v1756 = vpack.c.b16 %v1752, %v1751
        %v1762 = vsel %vm472, %v1736, 0
        %1764 = vmatprep.subr.bf16.mxu0 0
        %1765 = vmatpush1.bf16.msra.mxu0 0
        %1766 = vmatprep.subr.bf16.mxu0 0
        %1767 = vmatpush1.bf16.msra.mxu0 0
        %1768 = vmatprep.subr.bf16.mxu0 0
        %1769 = vmatpush1.bf16.msra.mxu0 0
        %1770 = vmatprep.subr.bf16.mxu0 0
        %1771 = vmatpush1.bf16.msra.mxu0 0
        %1772 = vmatprep.subr.bf16.mxu0 0
        %1773 = vmatpush1.bf16.msra.mxu0 %v1756
        %1774 = vmatprep.subr.bf16.mxu0 0
        %1775 = vmatpush1.bf16.msra.mxu0 %v1755
        %1776 = vmatprep.subr.bf16.mxu0 0
        %1777 = vmatpush1.bf16.msra.mxu0 %v1754
        %1778 = vmatprep.subr.bf16.mxu0 0
        %1779 = vmatpush1.bf16.msra.mxu0 %v1753
        %1780 = vmatprep.subr.bf16.mxu0 0
        %1781 = vmatpush2.bf16.msra.mxu0 0
        %1782 = vmatprep.subr.bf16.mxu0 0
        %1783 = vmatpush2.bf16.msra.mxu0 0
        %1784 = vmatprep.subr.bf16.mxu0 0
        %1785 = vmatpush2.bf16.msra.mxu0 0
        %1786 = vmatprep.subr.bf16.mxu0 0
        %1787 = vmatpush2.bf16.msra.mxu0 0
        %1788 = vmatprep.subr.bf16.mxu0 0
        %1789 = vmatpush2.bf16.msra.mxu0 0
        %1790 = vmatprep.subr.bf16.mxu0 0
        %1791 = vmatpush2.bf16.msra.mxu0 0
        %1792 = vmatprep.subr.bf16.mxu0 0
        %1793 = vmatpush2.bf16.msra.mxu0 0
        %1794 = vmatprep.subr.bf16.mxu0 0
        %1795 = vmatpush2.bf16.msra.mxu0 0
        %1796 = vmatprep.mubr.bf16.mxu0 0
        %1797 = vmatmul.mubr.bf16.gmra.mxu0 %v1762
        %v1798 = vpop.f32.mrf.mxu0
        %v1799 = vadd.f32 %v317, %v1798
        %v1800 = vpop.f32.mrf.mxu0
        %v1801 = vpop.f32.mrf.mxu0
        %v1802 = vpop.f32.mrf.mxu0
        %1803 = vdwg.mxu0
        %1804 = vst [vmem:[%s232] sm:$0x3] %v1799
        %s1805 = sand.u32 %s142, 1
        %s1806 = scalar_lea.sflag [#allocation3], %s1805
        %s1807 = sand.u32 %s142, 1
        %s1808 = smul.addr %s1807, 2
        %s1809 = scalar_lea.vmem [#allocation2], %s1808
        // Predicated region
        $region41: #{albert_base_forward.1} parent=39 // pred_check
          %p1810 = pneg %p152
        $region42: #{albert_base_forward.1} parent=39 // pred_check_branch
          %1812 = sbr.rel (%p1810) target = $region44
        $region43: #{albert_base_forward.1} parent=39 // pred_region
          %s1814 = ssub.s32 32, 32
          %1815 = vsyncadd %s1806, %s1814
          %s1816 = smul.addr %s19, 32
          %s1817 = scalar_lea.hbm %s5, %s1816
          %s1819 = sshll.u32 %s1809, 4
          %s1820 = int_to_ptr.vmem [resolvable:$true] %s1819
          %1822 = dma.vmem_to_hbm [thread:$0]  %s1820, 32, %s1817, %s1806
        $region44: #{albert_base_forward.1} parent=39 // pred_fallthru
          _
      $region40: #{albert_base_forward.1} parent=5 // pred_fallthru
        _
      %p1823 = scmp.le.s32.totalorder 2, %s14
      // Predicated region
      $region45: #{albert_base_forward.1} parent=5 // pred_check
        %p1824 = pneg %p1823
      $region46: #{albert_base_forward.1} parent=5 // pred_check_branch
        %1826 = sbr.rel (%p1824) target = $region48
      $region47: #{albert_base_forward.1} parent=5 // pred_region
        %s1827 = ssub.s32 %s14, 2
        // Predicated region
        $region49: #{albert_base_forward.1} parent=47 // pred_check
          %p1828 = pneg %p158
        $region50: #{albert_base_forward.1} parent=47 // pred_check_branch
          %1830 = sbr.rel (%p1828) target = $region52
        $region51: #{albert_base_forward.1} parent=47 // pred_region
          %s1831 = sand.u32 %s143, 1
          %s1832 = scalar_lea.sflag [#allocation3], %s1831
          %s1833 = sand.u32 %s143, 1
          %s1834 = smul.addr %s1833, 2
          %s1835 = scalar_lea.vmem [#allocation2], %s1834
          %1836 = dma.done %s1832, 32
        $region52: #{albert_base_forward.1} parent=47 // pred_fallthru
          _
      $region48: #{albert_base_forward.1} parent=5 // pred_fallthru
        _
    $region6: #{albert_base_forward.1} parent=1 // loop_footer
      %s18 = sadd.s32 1, %s14
    $region7: #{albert_base_forward.1} parent=1 // loop_footer_branch
      %13 = sbr.rel target = $region3
    $region8: #{albert_base_forward.1} parent=1 // loop_exit
      _
    %1837 = vsyncpa [#allocation3], 1
    %s1838 = scalar_lea.sflag [#allocation3], 1
    %1839 = vsyncpa %s1838, 1

</llo_original>
